<compile_context>
chip_gen: v7x
topology: tpu7x:2x2x1
jax: 0.10.0
libtpu: 0.0.40
codegen_flags: <defaults>
</compile_context>

<pallas_src>
import jax
import jax.numpy as jnp
from jax.experimental import pallas as pl
from jax.experimental.pallas import tpu as pltpu

FILTER_SIZES = (2, 3, 4, 5)
KMAX = max(FILTER_SIZES)
PAD = KMAX - 1          # universal symmetric time padding covering every per-filter pad
LANE = 128              # TPU lane width: fused conv channel dim is padded to a multiple of this


def textcnn_kernel(ids_ref,       # SMEM (Bp, L) int32      scalar-prefetched token ids
                   emb_ref,       # VMEM (V, 1, E) bf16     embedding table
                   wconv_ref,     # VMEM (KMAX, E, C4p) bf16 fused per-tap conv weights
                   bconv_ref,     # VMEM (1, C4p) f32       fused conv bias
                   mask_ref,      # VMEM (T_max, C4p) f32   pooling mask (1/(L+k-1) or 0)
                   wfc_ref,       # VMEM (C4p, C) f32       fused classifier weight
                   bfc_ref,       # VMEM (1, C) f32         classifier bias
                   out_ref,       # VMEM (TB, C) f32        logits tile
                   x_scratch):    # VMEM (TB, L + 2*PAD, E) bf16 padded embedded tile
    bt = pl.program_id(0)
    TB, Lp, _ = x_scratch.shape
    L = Lp - 2 * PAD
    T_max = mask_ref.shape[0]          # = L + KMAX - 1
    C4p = wconv_ref.shape[-1]

    # ---- Embedding gather + padding, fully in VMEM (no HBM activation round trip). ----
    # Zero every step: with a "parallel" grid the second TensorCore never sees step 0,
    # so the pad halo must be re-established per tile.
    x_scratch[...] = jnp.zeros_like(x_scratch)
    # TODO(synk): static TB*L row-gather loop is fine at these shapes; for large B*L switch
    # to a DMA gather or a one-hot MXU gather instead of unrolling.
    for bb in range(TB):
        for l in range(L):
            tok = ids_ref[bt * TB + bb, l]                       # dynamic SMEM scalar read
            x_scratch[bb, PAD + l:PAD + l + 1, :] = emb_ref[tok]  # (1, E) bf16 row

    # ---- Fused conv: one bf16 matmul per tap; all 4 filter banks share the N axis. ----
    acc = jnp.zeros((TB, T_max, C4p), jnp.float32)
    for j in range(KMAX):
        xs = x_scratch[:, pl.ds(j, T_max), :]          # (TB, T_max, E) bf16, ref slice
        acc = acc + jax.lax.dot_general(
            xs, wconv_ref[j],                          # (E, C4p) bf16
            dimension_numbers=(((2,), (0,)), ((), ())),
            preferred_element_type=jnp.float32)

    acc = jnp.maximum(acc + bconv_ref[...], 0.0)       # bias + ReLU, f32, lane-dense

    # ---- AdaptiveAvgPool1d(1): mask folds validity (t < L+k-1) AND the 1/(L+k-1) scale. ----
    feat = jnp.sum(acc * mask_ref[...], axis=1)        # (TB, C4p) f32

    # ---- Classifier (Dropout = identity in eval). Padded lanes hit zero rows of wfc. ----
    out_ref[...] = (jnp.dot(feat, wfc_ref[...], preferred_element_type=jnp.float32)
                    + bfc_ref[...])


def textcnn_forward(token_ids, params, *, block_b=8):
    """Fused TextCNN forward. token_ids: (B, L) int. Returns (B, num_classes) f32 logits."""
    V, E = params["embedding"].shape
    B, L = token_ids.shape
    F = params["conv_w"].shape[-1]
    C = params["fc_w"].shape[-1]
    C4 = len(FILTER_SIZES) * F
    C4p = ((C4 + LANE - 1) // LANE) * LANE             # lane-dense fused channel count
    T_max = L + KMAX - 1

    # ---- Pack the 4 conv banks into one tap-major weight tensor + bias + mask + fc. ----
    w_fused = jnp.zeros((KMAX, E, C4p), jnp.float32)
    b_fused = jnp.zeros((1, C4p), jnp.float32)
    mask = jnp.zeros((T_max, C4p), jnp.float32)
    wc_fused = jnp.zeros((C4p, C), jnp.float32)
    for fi, k in enumerate(FILTER_SIZES):
        off = KMAX - k                                 # aligns pad=k-1 with the common PAD
        col = fi * F
        w_fused = w_fused.at[off:off + k, :, col:col + F].set(params["conv_w"][fi, :k])
        b_fused = b_fused.at[0, col:col + F].set(params["conv_b"][fi, 0])
        Tk = L + k - 1                                 # PyTorch Conv1d(pad=k-1) output length
        mask = mask.at[:Tk, col:col + F].set(1.0 / Tk)
        wc_fused = wc_fused.at[col:col + F, :].set(params["fc_w"][fi])

    emb = params["embedding"].astype(jnp.bfloat16).reshape(V, 1, E)
    w_fused = w_fused.astype(jnp.bfloat16)

    # ---- Batch tiling: HBM->VMEM pipelining + megacore-parallel batch axis (v7x). ----
    TB = max(1, min(block_b, B))
    Bp = ((B + TB - 1) // TB) * TB
    ids = token_ids.astype(jnp.int32)
    if Bp != B:
        ids = jnp.pad(ids, ((0, Bp - B), (0, 0)))

    out = pl.pallas_call(
        textcnn_kernel,
        out_shape=jax.ShapeDtypeStruct((Bp, C), jnp.float32),
        grid_spec=pltpu.PrefetchScalarGridSpec(
            num_scalar_prefetch=1,                     # token ids -> SMEM
            grid=(Bp // TB,),
            in_specs=[
                pl.BlockSpec((V, 1, E), lambda b, ids_smem: (0, 0, 0)),        # embedding
                pl.BlockSpec((KMAX, E, C4p), lambda b, ids_smem: (0, 0, 0)),   # fused conv W
                pl.BlockSpec((1, C4p), lambda b, ids_smem: (0, 0)),            # fused conv b
                pl.BlockSpec((T_max, C4p), lambda b, ids_smem: (0, 0)),        # pooling mask
                pl.BlockSpec((C4p, C), lambda b, ids_smem: (0, 0)),            # fused fc W
                pl.BlockSpec((1, C), lambda b, ids_smem: (0, 0)),              # fc bias
            ],
            out_specs=pl.BlockSpec((TB, C), lambda b, ids_smem: (b, 0)),
            scratch_shapes=[pltpu.VMEM((TB, L + 2 * PAD, E), jnp.bfloat16)],
        ),
        compiler_params=pltpu.CompilerParams(
            dimension_semantics=("parallel",),         # batch tiles shard over TCs on v7x
            vmem_limit_bytes=32 * 1024 * 1024,         # tiny footprint; safe on v7x's 64 MiB
        ),
    )(ids, emb, w_fused, b_fused, mask, wc_fused, params["fc_b"])
    return out[:B]


def textcnn_reference(token_ids, params):
    """Plain-JAX f32 reference matching PyTorch semantics (NCL Conv1d, ReLU, avgpool, linear)."""
    emb = jnp.take(params["embedding"], token_ids, axis=0)        # (B, L, E)
    x = jnp.transpose(emb, (0, 2, 1))                             # (B, E, L)  == NCL
    feats = []
    for fi, k in enumerate(FILTER_SIZES):
        w = params["conv_w"][fi, :k]                              # (k, E, F)
        w_oih = jnp.transpose(w, (2, 1, 0))                       # (F, E, k)  torch layout
        out = jax.lax.conv_general_dilated(
            x, w_oih, window_strides=(1,), padding=[(k - 1, k - 1)],
            dimension_numbers=("NCH", "OIH", "NCH"))
        out = out + params["conv_b"][fi].reshape(1, -1, 1)
        out = jnp.maximum(out, 0.0)
        feats.append(jnp.mean(out, axis=2))                       # (B, F)
    feat = jnp.concatenate(feats, axis=1)                         # (B, 4F)
    nF, F, C = params["fc_w"].shape
    return feat @ params["fc_w"].reshape(nF * F, C) + params["fc_b"]


def init_params(key, vocab_size, embedding_dim, num_filters, num_classes):
    ks = jax.random.split(key, 4 + len(FILTER_SIZES))
    embedding = 0.1 * jax.random.normal(ks[0], (vocab_size, embedding_dim), jnp.float32)
    conv_w = jnp.zeros((len(FILTER_SIZES), KMAX, embedding_dim, num_filters), jnp.float32)
    for fi, k in enumerate(FILTER_SIZES):
        w = 0.1 * jax.random.normal(ks[1 + fi], (k, embedding_dim, num_filters), jnp.float32)
        conv_w = conv_w.at[fi, :k].set(w)
    conv_b = 0.1 * jax.random.normal(ks[-3], (len(FILTER_SIZES), 1, num_filters), jnp.float32)
    fc_w = 0.1 * jax.random.normal(ks[-2], (len(FILTER_SIZES), num_filters, num_classes),
                                   jnp.float32)
    fc_b = 0.1 * jax.random.normal(ks[-1], (1, num_classes), jnp.float32)
    return dict(embedding=embedding, conv_w=conv_w, conv_b=conv_b, fc_w=fc_w, fc_b=fc_b)


if __name__ == "__main__":
    # Shapes implied by the module: batch=2, seq_len = max_seq_len = 8, embedding_dim=32,
    # vocab_size=64, num_filters = max_seq_len = 8, num_classes=5.
    B, L, E, V, C = 2, 8, 32, 64, 5
    F = L  # num_filters = max_seq_len

    key = jax.random.PRNGKey(0)
    k_tok, k_par = jax.random.split(key)
    token_ids = jax.random.randint(k_tok, (B, L), 0, V, dtype=jnp.int32)
    params = init_params(k_par, V, E, F, C)

    out = jax.block_until_ready(textcnn_forward(token_ids, params))
    ref = jax.block_until_ready(textcnn_reference(token_ids, params))

    assert out.shape == (B, C), out.shape
    # bf16 matmul operands (f32 accumulation) vs an all-f32 reference -> slightly looser tol.
    assert jnp.allclose(out, ref, atol=1e-2, rtol=1e-2), (out, ref)
    print("KERNEL_OK")
</pallas_src>

<mosaic_0001>
module attributes {stable_mosaic.version = 11 : i64} {
  func.func @textcnn_kernel(%arg0: i32, %arg1: memref<2x8xi32, #tpu.memory_space<smem>>, %arg2: memref<64x1x32xbf16, #tpu.memory_space<vmem>>, %arg3: memref<5x32x128xbf16, #tpu.memory_space<vmem>>, %arg4: memref<1x128xf32, #tpu.memory_space<vmem>>, %arg5: memref<12x128xf32, #tpu.memory_space<vmem>>, %arg6: memref<128x5xf32, #tpu.memory_space<vmem>>, %arg7: memref<1x5xf32, #tpu.memory_space<vmem>>, %arg8: memref<2x5xf32, #tpu.memory_space<vmem>>, %arg9: memref<2x16x32xbf16, #tpu.memory_space<vmem>>) attributes {dimension_semantics = [#tpu.dimension_semantics<parallel>], iteration_bounds = array<i64: 1>, scalar_prefetch = 1 : i64, scratch_operands = 1 : i64, tpu.core_type = #tpu.core_type<tc>, window_params = [{pipeline_mode = #tpu.pipeline_mode<synchronous>, transform_indices = @transform_0, window_bounds = array<i64: 64, 1, 32>}, {pipeline_mode = #tpu.pipeline_mode<synchronous>, transform_indices = @transform_1, window_bounds = array<i64: 5, 32, 128>}, {pipeline_mode = #tpu.pipeline_mode<synchronous>, transform_indices = @transform_2, window_bounds = array<i64: 1, 128>}, {pipeline_mode = #tpu.pipeline_mode<synchronous>, transform_indices = @transform_3, window_bounds = array<i64: 12, 128>}, {pipeline_mode = #tpu.pipeline_mode<synchronous>, transform_indices = @transform_4, window_bounds = array<i64: 128, 5>}, {pipeline_mode = #tpu.pipeline_mode<synchronous>, transform_indices = @transform_5, window_bounds = array<i64: 1, 5>}, {transform_indices = @transform_6, window_bounds = array<i64: 2, 5>}]} {
    %cst = arith.constant 0.000000e+00 : bf16
    %0 = vector.broadcast %cst : bf16 to vector<2x16x32xbf16>
    %c0 = arith.constant 0 : index
    %c0_0 = arith.constant 0 : index
    %c0_1 = arith.constant 0 : index
    %1 = vector.load %arg9[%c0, %c0_0, %c0_1] : memref<2x16x32xbf16, #tpu.memory_space<vmem>>, vector<2x16x32xbf16>
    tpu.vector_store %arg9[%c0, %c0_0, %c0_1], %0 {strides = array<i32>} : memref<2x16x32xbf16, #tpu.memory_space<vmem>>, vector<2x16x32xbf16>,
    %c2_i32 = arith.constant 2 : i32
    %2 = arith.muli %arg0, %c2_i32 : i32
    %c0_i32 = arith.constant 0 : i32
    %3 = arith.addi %2, %c0_i32 : i32
    %4 = arith.index_cast %3 : i32 to index
    %c0_2 = arith.constant 0 : index
    %5 = memref.load %arg1[%4, %c0_2] : memref<2x8xi32, #tpu.memory_space<smem>>
    %6 = arith.index_cast %5 : i32 to index
    %c0_3 = arith.constant 0 : index
    %c0_4 = arith.constant 0 : index
    %7 = vector.load %arg2[%6, %c0_3, %c0_4] : memref<64x1x32xbf16, #tpu.memory_space<vmem>>, vector<1x1x32xbf16>
    %8 = vector.shape_cast %7 : vector<1x1x32xbf16> to vector<1x32xbf16>
    %c0_5 = arith.constant 0 : index
    %c4 = arith.constant 4 : index
    %c0_6 = arith.constant 0 : index
    %9 = vector.load %arg9[%c0_5, %c4, %c0_6] : memref<2x16x32xbf16, #tpu.memory_space<vmem>>, vector<1x1x32xbf16>
    %10 = vector.shape_cast %9 : vector<1x1x32xbf16> to vector<1x32xbf16>
    %11 = vector.shape_cast %8 : vector<1x32xbf16> to vector<1x1x32xbf16>
    tpu.vector_store %arg9[%c0_5, %c4, %c0_6], %11 {strides = array<i32>} : memref<2x16x32xbf16, #tpu.memory_space<vmem>>, vector<1x1x32xbf16>,
    %c2_i32_7 = arith.constant 2 : i32
    %12 = arith.muli %arg0, %c2_i32_7 : i32
    %c0_i32_8 = arith.constant 0 : i32
    %13 = arith.addi %12, %c0_i32_8 : i32
    %14 = arith.index_cast %13 : i32 to index
    %c1 = arith.constant 1 : index
    %15 = memref.load %arg1[%14, %c1] : memref<2x8xi32, #tpu.memory_space<smem>>
    %16 = arith.index_cast %15 : i32 to index
    %c0_9 = arith.constant 0 : index
    %c0_10 = arith.constant 0 : index
    %17 = vector.load %arg2[%16, %c0_9, %c0_10] : memref<64x1x32xbf16, #tpu.memory_space<vmem>>, vector<1x1x32xbf16>
    %18 = vector.shape_cast %17 : vector<1x1x32xbf16> to vector<1x32xbf16>
    %c0_11 = arith.constant 0 : index
    %c5 = arith.constant 5 : index
    %c0_12 = arith.constant 0 : index
    %19 = vector.load %arg9[%c0_11, %c5, %c0_12] : memref<2x16x32xbf16, #tpu.memory_space<vmem>>, vector<1x1x32xbf16>
    %20 = vector.shape_cast %19 : vector<1x1x32xbf16> to vector<1x32xbf16>
    %21 = vector.shape_cast %18 : vector<1x32xbf16> to vector<1x1x32xbf16>
    tpu.vector_store %arg9[%c0_11, %c5, %c0_12], %21 {strides = array<i32>} : memref<2x16x32xbf16, #tpu.memory_space<vmem>>, vector<1x1x32xbf16>,
    %c2_i32_13 = arith.constant 2 : i32
    %22 = arith.muli %arg0, %c2_i32_13 : i32
    %c0_i32_14 = arith.constant 0 : i32
    %23 = arith.addi %22, %c0_i32_14 : i32
    %24 = arith.index_cast %23 : i32 to index
    %c2 = arith.constant 2 : index
    %25 = memref.load %arg1[%24, %c2] : memref<2x8xi32, #tpu.memory_space<smem>>
    %26 = arith.index_cast %25 : i32 to index
    %c0_15 = arith.constant 0 : index
    %c0_16 = arith.constant 0 : index
    %27 = vector.load %arg2[%26, %c0_15, %c0_16] : memref<64x1x32xbf16, #tpu.memory_space<vmem>>, vector<1x1x32xbf16>
    %28 = vector.shape_cast %27 : vector<1x1x32xbf16> to vector<1x32xbf16>
    %c0_17 = arith.constant 0 : index
    %c6 = arith.constant 6 : index
    %c0_18 = arith.constant 0 : index
    %29 = vector.load %arg9[%c0_17, %c6, %c0_18] : memref<2x16x32xbf16, #tpu.memory_space<vmem>>, vector<1x1x32xbf16>
    %30 = vector.shape_cast %29 : vector<1x1x32xbf16> to vector<1x32xbf16>
    %31 = vector.shape_cast %28 : vector<1x32xbf16> to vector<1x1x32xbf16>
    tpu.vector_store %arg9[%c0_17, %c6, %c0_18], %31 {strides = array<i32>} : memref<2x16x32xbf16, #tpu.memory_space<vmem>>, vector<1x1x32xbf16>,
    %c2_i32_19 = arith.constant 2 : i32
    %32 = arith.muli %arg0, %c2_i32_19 : i32
    %c0_i32_20 = arith.constant 0 : i32
    %33 = arith.addi %32, %c0_i32_20 : i32
    %34 = arith.index_cast %33 : i32 to index
    %c3 = arith.constant 3 : index
    %35 = memref.load %arg1[%34, %c3] : memref<2x8xi32, #tpu.memory_space<smem>>
    %36 = arith.index_cast %35 : i32 to index
    %c0_21 = arith.constant 0 : index
    %c0_22 = arith.constant 0 : index
    %37 = vector.load %arg2[%36, %c0_21, %c0_22] : memref<64x1x32xbf16, #tpu.memory_space<vmem>>, vector<1x1x32xbf16>
    %38 = vector.shape_cast %37 : vector<1x1x32xbf16> to vector<1x32xbf16>
    %c0_23 = arith.constant 0 : index
    %c7 = arith.constant 7 : index
    %c0_24 = arith.constant 0 : index
    %39 = vector.load %arg9[%c0_23, %c7, %c0_24] : memref<2x16x32xbf16, #tpu.memory_space<vmem>>, vector<1x1x32xbf16>
    %40 = vector.shape_cast %39 : vector<1x1x32xbf16> to vector<1x32xbf16>
    %41 = vector.shape_cast %38 : vector<1x32xbf16> to vector<1x1x32xbf16>
    tpu.vector_store %arg9[%c0_23, %c7, %c0_24], %41 {strides = array<i32>} : memref<2x16x32xbf16, #tpu.memory_space<vmem>>, vector<1x1x32xbf16>,
    %c2_i32_25 = arith.constant 2 : i32
    %42 = arith.muli %arg0, %c2_i32_25 : i32
    %c0_i32_26 = arith.constant 0 : i32
    %43 = arith.addi %42, %c0_i32_26 : i32
    %44 = arith.index_cast %43 : i32 to index
    %c4_27 = arith.constant 4 : index
    %45 = memref.load %arg1[%44, %c4_27] : memref<2x8xi32, #tpu.memory_space<smem>>
    %46 = arith.index_cast %45 : i32 to index
    %c0_28 = arith.constant 0 : index
    %c0_29 = arith.constant 0 : index
    %47 = vector.load %arg2[%46, %c0_28, %c0_29] : memref<64x1x32xbf16, #tpu.memory_space<vmem>>, vector<1x1x32xbf16>
    %48 = vector.shape_cast %47 : vector<1x1x32xbf16> to vector<1x32xbf16>
    %c0_30 = arith.constant 0 : index
    %c8 = arith.constant 8 : index
    %c0_31 = arith.constant 0 : index
    %49 = vector.load %arg9[%c0_30, %c8, %c0_31] : memref<2x16x32xbf16, #tpu.memory_space<vmem>>, vector<1x1x32xbf16>
    %50 = vector.shape_cast %49 : vector<1x1x32xbf16> to vector<1x32xbf16>
    %51 = vector.shape_cast %48 : vector<1x32xbf16> to vector<1x1x32xbf16>
    tpu.vector_store %arg9[%c0_30, %c8, %c0_31], %51 {strides = array<i32>} : memref<2x16x32xbf16, #tpu.memory_space<vmem>>, vector<1x1x32xbf16>,
    %c2_i32_32 = arith.constant 2 : i32
    %52 = arith.muli %arg0, %c2_i32_32 : i32
    %c0_i32_33 = arith.constant 0 : i32
    %53 = arith.addi %52, %c0_i32_33 : i32
    %54 = arith.index_cast %53 : i32 to index
    %c5_34 = arith.constant 5 : index
    %55 = memref.load %arg1[%54, %c5_34] : memref<2x8xi32, #tpu.memory_space<smem>>
    %56 = arith.index_cast %55 : i32 to index
    %c0_35 = arith.constant 0 : index
    %c0_36 = arith.constant 0 : index
    %57 = vector.load %arg2[%56, %c0_35, %c0_36] : memref<64x1x32xbf16, #tpu.memory_space<vmem>>, vector<1x1x32xbf16>
    %58 = vector.shape_cast %57 : vector<1x1x32xbf16> to vector<1x32xbf16>
    %c0_37 = arith.constant 0 : index
    %c9 = arith.constant 9 : index
    %c0_38 = arith.constant 0 : index
    %59 = vector.load %arg9[%c0_37, %c9, %c0_38] : memref<2x16x32xbf16, #tpu.memory_space<vmem>>, vector<1x1x32xbf16>
    %60 = vector.shape_cast %59 : vector<1x1x32xbf16> to vector<1x32xbf16>
    %61 = vector.shape_cast %58 : vector<1x32xbf16> to vector<1x1x32xbf16>
    tpu.vector_store %arg9[%c0_37, %c9, %c0_38], %61 {strides = array<i32>} : memref<2x16x32xbf16, #tpu.memory_space<vmem>>, vector<1x1x32xbf16>,
    %c2_i32_39 = arith.constant 2 : i32
    %62 = arith.muli %arg0, %c2_i32_39 : i32
    %c0_i32_40 = arith.constant 0 : i32
    %63 = arith.addi %62, %c0_i32_40 : i32
    %64 = arith.index_cast %63 : i32 to index
    %c6_41 = arith.constant 6 : index
    %65 = memref.load %arg1[%64, %c6_41] : memref<2x8xi32, #tpu.memory_space<smem>>
    %66 = arith.index_cast %65 : i32 to index
    %c0_42 = arith.constant 0 : index
    %c0_43 = arith.constant 0 : index
    %67 = vector.load %arg2[%66, %c0_42, %c0_43] : memref<64x1x32xbf16, #tpu.memory_space<vmem>>, vector<1x1x32xbf16>
    %68 = vector.shape_cast %67 : vector<1x1x32xbf16> to vector<1x32xbf16>
    %c0_44 = arith.constant 0 : index
    %c10 = arith.constant 10 : index
    %c0_45 = arith.constant 0 : index
    %69 = vector.load %arg9[%c0_44, %c10, %c0_45] : memref<2x16x32xbf16, #tpu.memory_space<vmem>>, vector<1x1x32xbf16>
    %70 = vector.shape_cast %69 : vector<1x1x32xbf16> to vector<1x32xbf16>
    %71 = vector.shape_cast %68 : vector<1x32xbf16> to vector<1x1x32xbf16>
    tpu.vector_store %arg9[%c0_44, %c10, %c0_45], %71 {strides = array<i32>} : memref<2x16x32xbf16, #tpu.memory_space<vmem>>, vector<1x1x32xbf16>,
    %c2_i32_46 = arith.constant 2 : i32
    %72 = arith.muli %arg0, %c2_i32_46 : i32
    %c0_i32_47 = arith.constant 0 : i32
    %73 = arith.addi %72, %c0_i32_47 : i32
    %74 = arith.index_cast %73 : i32 to index
    %c7_48 = arith.constant 7 : index
    %75 = memref.load %arg1[%74, %c7_48] : memref<2x8xi32, #tpu.memory_space<smem>>
    %76 = arith.index_cast %75 : i32 to index
    %c0_49 = arith.constant 0 : index
    %c0_50 = arith.constant 0 : index
    %77 = vector.load %arg2[%76, %c0_49, %c0_50] : memref<64x1x32xbf16, #tpu.memory_space<vmem>>, vector<1x1x32xbf16>
    %78 = vector.shape_cast %77 : vector<1x1x32xbf16> to vector<1x32xbf16>
    %c0_51 = arith.constant 0 : index
    %c11 = arith.constant 11 : index
    %c0_52 = arith.constant 0 : index
    %79 = vector.load %arg9[%c0_51, %c11, %c0_52] : memref<2x16x32xbf16, #tpu.memory_space<vmem>>, vector<1x1x32xbf16>
    %80 = vector.shape_cast %79 : vector<1x1x32xbf16> to vector<1x32xbf16>
    %81 = vector.shape_cast %78 : vector<1x32xbf16> to vector<1x1x32xbf16>
    tpu.vector_store %arg9[%c0_51, %c11, %c0_52], %81 {strides = array<i32>} : memref<2x16x32xbf16, #tpu.memory_space<vmem>>, vector<1x1x32xbf16>,
    %c2_i32_53 = arith.constant 2 : i32
    %82 = arith.muli %arg0, %c2_i32_53 : i32
    %c1_i32 = arith.constant 1 : i32
    %83 = arith.addi %82, %c1_i32 : i32
    %84 = arith.index_cast %83 : i32 to index
    %c0_54 = arith.constant 0 : index
    %85 = memref.load %arg1[%84, %c0_54] : memref<2x8xi32, #tpu.memory_space<smem>>
    %86 = arith.index_cast %85 : i32 to index
    %c0_55 = arith.constant 0 : index
    %c0_56 = arith.constant 0 : index
    %87 = vector.load %arg2[%86, %c0_55, %c0_56] : memref<64x1x32xbf16, #tpu.memory_space<vmem>>, vector<1x1x32xbf16>
    %88 = vector.shape_cast %87 : vector<1x1x32xbf16> to vector<1x32xbf16>
    %c1_57 = arith.constant 1 : index
    %c4_58 = arith.constant 4 : index
    %c0_59 = arith.constant 0 : index
    %89 = vector.load %arg9[%c1_57, %c4_58, %c0_59] : memref<2x16x32xbf16, #tpu.memory_space<vmem>>, vector<1x1x32xbf16>
    %90 = vector.shape_cast %89 : vector<1x1x32xbf16> to vector<1x32xbf16>
    %91 = vector.shape_cast %88 : vector<1x32xbf16> to vector<1x1x32xbf16>
    tpu.vector_store %arg9[%c1_57, %c4_58, %c0_59], %91 {strides = array<i32>} : memref<2x16x32xbf16, #tpu.memory_space<vmem>>, vector<1x1x32xbf16>,
    %c2_i32_60 = arith.constant 2 : i32
    %92 = arith.muli %arg0, %c2_i32_60 : i32
    %c1_i32_61 = arith.constant 1 : i32
    %93 = arith.addi %92, %c1_i32_61 : i32
    %94 = arith.index_cast %93 : i32 to index
    %c1_62 = arith.constant 1 : index
    %95 = memref.load %arg1[%94, %c1_62] : memref<2x8xi32, #tpu.memory_space<smem>>
    %96 = arith.index_cast %95 : i32 to index
    %c0_63 = arith.constant 0 : index
    %c0_64 = arith.constant 0 : index
    %97 = vector.load %arg2[%96, %c0_63, %c0_64] : memref<64x1x32xbf16, #tpu.memory_space<vmem>>, vector<1x1x32xbf16>
    %98 = vector.shape_cast %97 : vector<1x1x32xbf16> to vector<1x32xbf16>
    %c1_65 = arith.constant 1 : index
    %c5_66 = arith.constant 5 : index
    %c0_67 = arith.constant 0 : index
    %99 = vector.load %arg9[%c1_65, %c5_66, %c0_67] : memref<2x16x32xbf16, #tpu.memory_space<vmem>>, vector<1x1x32xbf16>
    %100 = vector.shape_cast %99 : vector<1x1x32xbf16> to vector<1x32xbf16>
    %101 = vector.shape_cast %98 : vector<1x32xbf16> to vector<1x1x32xbf16>
    tpu.vector_store %arg9[%c1_65, %c5_66, %c0_67], %101 {strides = array<i32>} : memref<2x16x32xbf16, #tpu.memory_space<vmem>>, vector<1x1x32xbf16>,
    %c2_i32_68 = arith.constant 2 : i32
    %102 = arith.muli %arg0, %c2_i32_68 : i32
    %c1_i32_69 = arith.constant 1 : i32
    %103 = arith.addi %102, %c1_i32_69 : i32
    %104 = arith.index_cast %103 : i32 to index
    %c2_70 = arith.constant 2 : index
    %105 = memref.load %arg1[%104, %c2_70] : memref<2x8xi32, #tpu.memory_space<smem>>
    %106 = arith.index_cast %105 : i32 to index
    %c0_71 = arith.constant 0 : index
    %c0_72 = arith.constant 0 : index
    %107 = vector.load %arg2[%106, %c0_71, %c0_72] : memref<64x1x32xbf16, #tpu.memory_space<vmem>>, vector<1x1x32xbf16>
    %108 = vector.shape_cast %107 : vector<1x1x32xbf16> to vector<1x32xbf16>
    %c1_73 = arith.constant 1 : index
    %c6_74 = arith.constant 6 : index
    %c0_75 = arith.constant 0 : index
    %109 = vector.load %arg9[%c1_73, %c6_74, %c0_75] : memref<2x16x32xbf16, #tpu.memory_space<vmem>>, vector<1x1x32xbf16>
    %110 = vector.shape_cast %109 : vector<1x1x32xbf16> to vector<1x32xbf16>
    %111 = vector.shape_cast %108 : vector<1x32xbf16> to vector<1x1x32xbf16>
    tpu.vector_store %arg9[%c1_73, %c6_74, %c0_75], %111 {strides = array<i32>} : memref<2x16x32xbf16, #tpu.memory_space<vmem>>, vector<1x1x32xbf16>,
    %c2_i32_76 = arith.constant 2 : i32
    %112 = arith.muli %arg0, %c2_i32_76 : i32
    %c1_i32_77 = arith.constant 1 : i32
    %113 = arith.addi %112, %c1_i32_77 : i32
    %114 = arith.index_cast %113 : i32 to index
    %c3_78 = arith.constant 3 : index
    %115 = memref.load %arg1[%114, %c3_78] : memref<2x8xi32, #tpu.memory_space<smem>>
    %116 = arith.index_cast %115 : i32 to index
    %c0_79 = arith.constant 0 : index
    %c0_80 = arith.constant 0 : index
    %117 = vector.load %arg2[%116, %c0_79, %c0_80] : memref<64x1x32xbf16, #tpu.memory_space<vmem>>, vector<1x1x32xbf16>
    %118 = vector.shape_cast %117 : vector<1x1x32xbf16> to vector<1x32xbf16>
    %c1_81 = arith.constant 1 : index
    %c7_82 = arith.constant 7 : index
    %c0_83 = arith.constant 0 : index
    %119 = vector.load %arg9[%c1_81, %c7_82, %c0_83] : memref<2x16x32xbf16, #tpu.memory_space<vmem>>, vector<1x1x32xbf16>
    %120 = vector.shape_cast %119 : vector<1x1x32xbf16> to vector<1x32xbf16>
    %121 = vector.shape_cast %118 : vector<1x32xbf16> to vector<1x1x32xbf16>
    tpu.vector_store %arg9[%c1_81, %c7_82, %c0_83], %121 {strides = array<i32>} : memref<2x16x32xbf16, #tpu.memory_space<vmem>>, vector<1x1x32xbf16>,
    %c2_i32_84 = arith.constant 2 : i32
    %122 = arith.muli %arg0, %c2_i32_84 : i32
    %c1_i32_85 = arith.constant 1 : i32
    %123 = arith.addi %122, %c1_i32_85 : i32
    %124 = arith.index_cast %123 : i32 to index
    %c4_86 = arith.constant 4 : index
    %125 = memref.load %arg1[%124, %c4_86] : memref<2x8xi32, #tpu.memory_space<smem>>
    %126 = arith.index_cast %125 : i32 to index
    %c0_87 = arith.constant 0 : index
    %c0_88 = arith.constant 0 : index
    %127 = vector.load %arg2[%126, %c0_87, %c0_88] : memref<64x1x32xbf16, #tpu.memory_space<vmem>>, vector<1x1x32xbf16>
    %128 = vector.shape_cast %127 : vector<1x1x32xbf16> to vector<1x32xbf16>
    %c1_89 = arith.constant 1 : index
    %c8_90 = arith.constant 8 : index
    %c0_91 = arith.constant 0 : index
    %129 = vector.load %arg9[%c1_89, %c8_90, %c0_91] : memref<2x16x32xbf16, #tpu.memory_space<vmem>>, vector<1x1x32xbf16>
    %130 = vector.shape_cast %129 : vector<1x1x32xbf16> to vector<1x32xbf16>
    %131 = vector.shape_cast %128 : vector<1x32xbf16> to vector<1x1x32xbf16>
    tpu.vector_store %arg9[%c1_89, %c8_90, %c0_91], %131 {strides = array<i32>} : memref<2x16x32xbf16, #tpu.memory_space<vmem>>, vector<1x1x32xbf16>,
    %c2_i32_92 = arith.constant 2 : i32
    %132 = arith.muli %arg0, %c2_i32_92 : i32
    %c1_i32_93 = arith.constant 1 : i32
    %133 = arith.addi %132, %c1_i32_93 : i32
    %134 = arith.index_cast %133 : i32 to index
    %c5_94 = arith.constant 5 : index
    %135 = memref.load %arg1[%134, %c5_94] : memref<2x8xi32, #tpu.memory_space<smem>>
    %136 = arith.index_cast %135 : i32 to index
    %c0_95 = arith.constant 0 : index
    %c0_96 = arith.constant 0 : index
    %137 = vector.load %arg2[%136, %c0_95, %c0_96] : memref<64x1x32xbf16, #tpu.memory_space<vmem>>, vector<1x1x32xbf16>
    %138 = vector.shape_cast %137 : vector<1x1x32xbf16> to vector<1x32xbf16>
    %c1_97 = arith.constant 1 : index
    %c9_98 = arith.constant 9 : index
    %c0_99 = arith.constant 0 : index
    %139 = vector.load %arg9[%c1_97, %c9_98, %c0_99] : memref<2x16x32xbf16, #tpu.memory_space<vmem>>, vector<1x1x32xbf16>
    %140 = vector.shape_cast %139 : vector<1x1x32xbf16> to vector<1x32xbf16>
    %141 = vector.shape_cast %138 : vector<1x32xbf16> to vector<1x1x32xbf16>
    tpu.vector_store %arg9[%c1_97, %c9_98, %c0_99], %141 {strides = array<i32>} : memref<2x16x32xbf16, #tpu.memory_space<vmem>>, vector<1x1x32xbf16>,
    %c2_i32_100 = arith.constant 2 : i32
    %142 = arith.muli %arg0, %c2_i32_100 : i32
    %c1_i32_101 = arith.constant 1 : i32
    %143 = arith.addi %142, %c1_i32_101 : i32
    %144 = arith.index_cast %143 : i32 to index
    %c6_102 = arith.constant 6 : index
    %145 = memref.load %arg1[%144, %c6_102] : memref<2x8xi32, #tpu.memory_space<smem>>
    %146 = arith.index_cast %145 : i32 to index
    %c0_103 = arith.constant 0 : index
    %c0_104 = arith.constant 0 : index
    %147 = vector.load %arg2[%146, %c0_103, %c0_104] : memref<64x1x32xbf16, #tpu.memory_space<vmem>>, vector<1x1x32xbf16>
    %148 = vector.shape_cast %147 : vector<1x1x32xbf16> to vector<1x32xbf16>
    %c1_105 = arith.constant 1 : index
    %c10_106 = arith.constant 10 : index
    %c0_107 = arith.constant 0 : index
    %149 = vector.load %arg9[%c1_105, %c10_106, %c0_107] : memref<2x16x32xbf16, #tpu.memory_space<vmem>>, vector<1x1x32xbf16>
    %150 = vector.shape_cast %149 : vector<1x1x32xbf16> to vector<1x32xbf16>
    %151 = vector.shape_cast %148 : vector<1x32xbf16> to vector<1x1x32xbf16>
    tpu.vector_store %arg9[%c1_105, %c10_106, %c0_107], %151 {strides = array<i32>} : memref<2x16x32xbf16, #tpu.memory_space<vmem>>, vector<1x1x32xbf16>,
    %c2_i32_108 = arith.constant 2 : i32
    %152 = arith.muli %arg0, %c2_i32_108 : i32
    %c1_i32_109 = arith.constant 1 : i32
    %153 = arith.addi %152, %c1_i32_109 : i32
    %154 = arith.index_cast %153 : i32 to index
    %c7_110 = arith.constant 7 : index
    %155 = memref.load %arg1[%154, %c7_110] : memref<2x8xi32, #tpu.memory_space<smem>>
    %156 = arith.index_cast %155 : i32 to index
    %c0_111 = arith.constant 0 : index
    %c0_112 = arith.constant 0 : index
    %157 = vector.load %arg2[%156, %c0_111, %c0_112] : memref<64x1x32xbf16, #tpu.memory_space<vmem>>, vector<1x1x32xbf16>
    %158 = vector.shape_cast %157 : vector<1x1x32xbf16> to vector<1x32xbf16>
    %c1_113 = arith.constant 1 : index
    %c11_114 = arith.constant 11 : index
    %c0_115 = arith.constant 0 : index
    %159 = vector.load %arg9[%c1_113, %c11_114, %c0_115] : memref<2x16x32xbf16, #tpu.memory_space<vmem>>, vector<1x1x32xbf16>
    %160 = vector.shape_cast %159 : vector<1x1x32xbf16> to vector<1x32xbf16>
    %161 = vector.shape_cast %158 : vector<1x32xbf16> to vector<1x1x32xbf16>
    tpu.vector_store %arg9[%c1_113, %c11_114, %c0_115], %161 {strides = array<i32>} : memref<2x16x32xbf16, #tpu.memory_space<vmem>>, vector<1x1x32xbf16>,
    %cst_116 = arith.constant 0.000000e+00 : f32
    %162 = vector.broadcast %cst_116 : f32 to vector<2x12x128xf32>
    %c0_117 = arith.constant 0 : index
    %c0_118 = arith.constant 0 : index
    %c0_119 = arith.constant 0 : index
    %163 = vector.load %arg9[%c0_117, %c0_118, %c0_119] : memref<2x16x32xbf16, #tpu.memory_space<vmem>>, vector<2x12x32xbf16>
    %c0_120 = arith.constant 0 : index
    %c0_121 = arith.constant 0 : index
    %c0_122 = arith.constant 0 : index
    %164 = vector.load %arg3[%c0_120, %c0_121, %c0_122] : memref<5x32x128xbf16, #tpu.memory_space<vmem>>, vector<1x32x128xbf16>
    %165 = vector.shape_cast %164 : vector<1x32x128xbf16> to vector<32x128xbf16>
    %cst_123 = arith.constant dense<0.000000e+00> : vector<2x12x128xf32>
    %166 = tpu.matmul %163, %165, %cst_123 {dimension_numbers = #tpu.dot_dimension_numbers<[2], [0], [0, 1], [1], [0, 0, 0, 1, 1, 1], [], []>} : vector<2x12x32xbf16>, vector<32x128xbf16>, vector<2x12x128xf32> -> vector<2x12x128xf32>
    %167 = arith.addf %162, %166 : vector<2x12x128xf32>
    %c0_124 = arith.constant 0 : index
    %c1_125 = arith.constant 1 : index
    %c0_126 = arith.constant 0 : index
    %168 = vector.load %arg9[%c0_124, %c1_125, %c0_126] : memref<2x16x32xbf16, #tpu.memory_space<vmem>>, vector<2x12x32xbf16>
    %c1_127 = arith.constant 1 : index
    %c0_128 = arith.constant 0 : index
    %c0_129 = arith.constant 0 : index
    %169 = vector.load %arg3[%c1_127, %c0_128, %c0_129] : memref<5x32x128xbf16, #tpu.memory_space<vmem>>, vector<1x32x128xbf16>
    %170 = vector.shape_cast %169 : vector<1x32x128xbf16> to vector<32x128xbf16>
    %cst_130 = arith.constant dense<0.000000e+00> : vector<2x12x128xf32>
    %171 = tpu.matmul %168, %170, %cst_130 {dimension_numbers = #tpu.dot_dimension_numbers<[2], [0], [0, 1], [1], [0, 0, 0, 1, 1, 1], [], []>} : vector<2x12x32xbf16>, vector<32x128xbf16>, vector<2x12x128xf32> -> vector<2x12x128xf32>
    %172 = arith.addf %167, %171 : vector<2x12x128xf32>
    %c0_131 = arith.constant 0 : index
    %c2_132 = arith.constant 2 : index
    %c0_133 = arith.constant 0 : index
    %173 = vector.load %arg9[%c0_131, %c2_132, %c0_133] : memref<2x16x32xbf16, #tpu.memory_space<vmem>>, vector<2x12x32xbf16>
    %c2_134 = arith.constant 2 : index
    %c0_135 = arith.constant 0 : index
    %c0_136 = arith.constant 0 : index
    %174 = vector.load %arg3[%c2_134, %c0_135, %c0_136] : memref<5x32x128xbf16, #tpu.memory_space<vmem>>, vector<1x32x128xbf16>
    %175 = vector.shape_cast %174 : vector<1x32x128xbf16> to vector<32x128xbf16>
    %cst_137 = arith.constant dense<0.000000e+00> : vector<2x12x128xf32>
    %176 = tpu.matmul %173, %175, %cst_137 {dimension_numbers = #tpu.dot_dimension_numbers<[2], [0], [0, 1], [1], [0, 0, 0, 1, 1, 1], [], []>} : vector<2x12x32xbf16>, vector<32x128xbf16>, vector<2x12x128xf32> -> vector<2x12x128xf32>
    %177 = arith.addf %172, %176 : vector<2x12x128xf32>
    %c0_138 = arith.constant 0 : index
    %c3_139 = arith.constant 3 : index
    %c0_140 = arith.constant 0 : index
    %178 = vector.load %arg9[%c0_138, %c3_139, %c0_140] : memref<2x16x32xbf16, #tpu.memory_space<vmem>>, vector<2x12x32xbf16>
    %c3_141 = arith.constant 3 : index
    %c0_142 = arith.constant 0 : index
    %c0_143 = arith.constant 0 : index
    %179 = vector.load %arg3[%c3_141, %c0_142, %c0_143] : memref<5x32x128xbf16, #tpu.memory_space<vmem>>, vector<1x32x128xbf16>
    %180 = vector.shape_cast %179 : vector<1x32x128xbf16> to vector<32x128xbf16>
    %cst_144 = arith.constant dense<0.000000e+00> : vector<2x12x128xf32>
    %181 = tpu.matmul %178, %180, %cst_144 {dimension_numbers = #tpu.dot_dimension_numbers<[2], [0], [0, 1], [1], [0, 0, 0, 1, 1, 1], [], []>} : vector<2x12x32xbf16>, vector<32x128xbf16>, vector<2x12x128xf32> -> vector<2x12x128xf32>
    %182 = arith.addf %177, %181 : vector<2x12x128xf32>
    %c0_145 = arith.constant 0 : index
    %c4_146 = arith.constant 4 : index
    %c0_147 = arith.constant 0 : index
    %183 = vector.load %arg9[%c0_145, %c4_146, %c0_147] : memref<2x16x32xbf16, #tpu.memory_space<vmem>>, vector<2x12x32xbf16>
    %c4_148 = arith.constant 4 : index
    %c0_149 = arith.constant 0 : index
    %c0_150 = arith.constant 0 : index
    %184 = vector.load %arg3[%c4_148, %c0_149, %c0_150] : memref<5x32x128xbf16, #tpu.memory_space<vmem>>, vector<1x32x128xbf16>
    %185 = vector.shape_cast %184 : vector<1x32x128xbf16> to vector<32x128xbf16>
    %cst_151 = arith.constant dense<0.000000e+00> : vector<2x12x128xf32>
    %186 = tpu.matmul %183, %185, %cst_151 {dimension_numbers = #tpu.dot_dimension_numbers<[2], [0], [0, 1], [1], [0, 0, 0, 1, 1, 1], [], []>} : vector<2x12x32xbf16>, vector<32x128xbf16>, vector<2x12x128xf32> -> vector<2x12x128xf32>
    %187 = arith.addf %182, %186 : vector<2x12x128xf32>
    %c0_152 = arith.constant 0 : index
    %c0_153 = arith.constant 0 : index
    %188 = vector.load %arg4[%c0_152, %c0_153] : memref<1x128xf32, #tpu.memory_space<vmem>>, vector<1x128xf32>
    %189 = vector.shape_cast %188 : vector<1x128xf32> to vector<1x1x128xf32>
    %190 = vector.broadcast %189 : vector<1x1x128xf32> to vector<2x12x128xf32>
    %191 = arith.addf %187, %190 : vector<2x12x128xf32>
    %cst_154 = arith.constant 0.000000e+00 : f32
    %192 = vector.broadcast %cst_154 : f32 to vector<2x12x128xf32>
    %193 = arith.maximumf %191, %192 : vector<2x12x128xf32>
    %c0_155 = arith.constant 0 : index
    %c0_156 = arith.constant 0 : index
    %194 = vector.load %arg5[%c0_155, %c0_156] : memref<12x128xf32, #tpu.memory_space<vmem>>, vector<12x128xf32>
    %195 = vector.shape_cast %194 : vector<12x128xf32> to vector<1x12x128xf32>
    %196 = vector.broadcast %195 : vector<1x12x128xf32> to vector<2x12x128xf32>
    %197 = arith.mulf %193, %196 : vector<2x12x128xf32>
    %cst_157 = arith.constant dense<0.000000e+00> : vector<2x128xf32>
    %198 = vector.multi_reduction <add>, %197, %cst_157 [1] : vector<2x12x128xf32> to vector<2x128xf32>
    %c0_158 = arith.constant 0 : index
    %c0_159 = arith.constant 0 : index
    %199 = vector.load %arg6[%c0_158, %c0_159] : memref<128x5xf32, #tpu.memory_space<vmem>>, vector<128x5xf32>
    %cst_160 = arith.constant dense<0.000000e+00> : vector<2x5xf32>
    %200 = tpu.matmul %198, %199, %cst_160 {dimension_numbers = #tpu.dot_dimension_numbers<[1], [0], [0], [1], [0, 0, 1, 1], [], []>} : vector<2x128xf32>, vector<128x5xf32>, vector<2x5xf32> -> vector<2x5xf32>
    %c0_161 = arith.constant 0 : index
    %c0_162 = arith.constant 0 : index
    %201 = vector.load %arg7[%c0_161, %c0_162] : memref<1x5xf32, #tpu.memory_space<vmem>>, vector<1x5xf32>
    %202 = vector.broadcast %201 : vector<1x5xf32> to vector<2x5xf32>
    %203 = arith.addf %200, %202 : vector<2x5xf32>
    %c0_163 = arith.constant 0 : index
    %c0_164 = arith.constant 0 : index
    %204 = vector.load %arg8[%c0_163, %c0_164] : memref<2x5xf32, #tpu.memory_space<vmem>>, vector<2x5xf32>
    tpu.vector_store %arg8[%c0_163, %c0_164], %203 {strides = array<i32>} : memref<2x5xf32, #tpu.memory_space<vmem>>, vector<2x5xf32>,
    return
  }
  func.func @transform_0(%arg0: i32, %arg1: memref<2x8xi32, #tpu.memory_space<smem>>) -> (i32, i32, i32) {
    %c0_i32 = arith.constant 0 : i32
    %c0_i32_0 = arith.constant 0 : i32
    %c0_i32_1 = arith.constant 0 : i32
    %c0_i32_2 = arith.constant 0 : i32
    return %c0_i32, %c0_i32_0, %c0_i32_1 : i32, i32, i32
  }
  func.func @transform_1(%arg0: i32, %arg1: memref<2x8xi32, #tpu.memory_space<smem>>) -> (i32, i32, i32) {
    %c0_i32 = arith.constant 0 : i32
    %c0_i32_0 = arith.constant 0 : i32
    %c0_i32_1 = arith.constant 0 : i32
    %c0_i32_2 = arith.constant 0 : i32
    return %c0_i32, %c0_i32_0, %c0_i32_1 : i32, i32, i32
  }
  func.func @transform_2(%arg0: i32, %arg1: memref<2x8xi32, #tpu.memory_space<smem>>) -> (i32, i32) {
    %c0_i32 = arith.constant 0 : i32
    %c0_i32_0 = arith.constant 0 : i32
    %c0_i32_1 = arith.constant 0 : i32
    return %c0_i32, %c0_i32_0 : i32, i32
  }
  func.func @transform_3(%arg0: i32, %arg1: memref<2x8xi32, #tpu.memory_space<smem>>) -> (i32, i32) {
    %c0_i32 = arith.constant 0 : i32
    %c0_i32_0 = arith.constant 0 : i32
    %c0_i32_1 = arith.constant 0 : i32
    return %c0_i32, %c0_i32_0 : i32, i32
  }
  func.func @transform_4(%arg0: i32, %arg1: memref<2x8xi32, #tpu.memory_space<smem>>) -> (i32, i32) {
    %c0_i32 = arith.constant 0 : i32
    %c0_i32_0 = arith.constant 0 : i32
    %c0_i32_1 = arith.constant 0 : i32
    return %c0_i32, %c0_i32_0 : i32, i32
  }
  func.func @transform_5(%arg0: i32, %arg1: memref<2x8xi32, #tpu.memory_space<smem>>) -> (i32, i32) {
    %c0_i32 = arith.constant 0 : i32
    %c0_i32_0 = arith.constant 0 : i32
    %c0_i32_1 = arith.constant 0 : i32
    return %c0_i32, %c0_i32_0 : i32, i32
  }
  func.func @transform_6(%arg0: i32, %arg1: memref<2x8xi32, #tpu.memory_space<smem>>) -> (i32, i32) {
    %c0_i32 = arith.constant 0 : i32
    %c0_i32_0 = arith.constant 0 : i32
    return %arg0, %c0_i32 : i32, i32
  }
}

</mosaic_0001>

<llo_original>
// kernel: tpu_custom_call.1
$region0: #{tpu_custom_call.1}
  #allocation0 [shape = 'u32[]', space=smem, size = 0x4, offset = 0x4, fixed_abs, tag = 'smem constant byte address 0x4 - core index']
  #allocation1 [shape = 'u32[144,128]{1,0:T(1,128)}', space=vmem, size = 0x12000, scoped, tag = 'internal scratch']
  #allocation2 [shape = 'bf16[2,16,32]{2,1,0:T(16,128)(2,1)}', space=vmem, size = 0x2000, scoped, tag = 'scratch operand']
  #allocation3 [shape = 's32[1]{0}', space=sflag, size = 0x4, scoped, tag = 'scoped memory for tpu_custom_call.1']
  #allocation4 [shape = 'u8[1024]{0}', space=smem, size = 0x400, scoped, tag = 'prefetched SMEM operand 0']
  %s0 = inlined_call_operand.vmem [shape: s32[2,8], index: 0, kind: input, shape index: {}]
  %s1 = inlined_call_operand.vmem [shape: bf16[64,1,32], index: 1, kind: input, shape index: {}]
  %s2 = inlined_call_operand.vmem [shape: bf16[5,32,128], index: 2, kind: input, shape index: {}]
  %s3 = inlined_call_operand.vmem [shape: f32[1,128], index: 3, kind: input, shape index: {}]
  %s4 = inlined_call_operand.vmem [shape: f32[12,128], index: 4, kind: input, shape index: {}]
  %s5 = inlined_call_operand.vmem [shape: f32[128,5], index: 5, kind: input, shape index: {}]
  %s6 = inlined_call_operand.vmem [shape: f32[1,5], index: 6, kind: input, shape index: {}]
  %s7 = inlined_call_operand.hbm [shape: f32[2,5], index: 7, kind: output, shape index: {}]
  %s8 = sld [smem:[#allocation0]]
  $region34: #{tpu_custom_call.1} parent=0
    _
  %s10 = ssub.s32 1, %s8
  %s11 = scalar_select 0, %s10, %s8
  %s12 = sshll.u32 %s0, 4
  %s13 = int_to_ptr.vmem [resolvable:$true] %s12
  %15 = dma.vmem_to_smem %s13, 32, [#allocation4], [#allocation3]
  %16 = dma.done [#allocation3], 32
  %17 = sfence
  $region1: #{tpu_custom_call.1} parent=0
    #allocation5 [shape = 'u8[1024]{0}', space=vmem, size = 0x400, scoped, tag = 'output window, operand 0, single buffered']
    #allocation6 [shape = 's32[1]{0}', space=sflag, size = 0x4, scoped, tag = 'scoped memory for tpu_custom_call.1']
    %18 = vsyncpa [#allocation6], 0
    // Predicated region
    $region2: #{tpu_custom_call.1} parent=1 // pred_check
      _
    $region3: #{tpu_custom_call.1} parent=1 // pred_check_branch
      %20 = sbr.rel (0) target = $region5
    $region4: #{tpu_custom_call.1} parent=1 // pred_region
      _
    $region5: #{tpu_custom_call.1} parent=1 // pred_fallthru
      _
    // Predicated region
    $region6: #{tpu_custom_call.1} parent=1 // pred_check
      _
    $region7: #{tpu_custom_call.1} parent=1 // pred_check_branch
      %22 = sbr.rel (0) target = $region9
    $region8: #{tpu_custom_call.1} parent=1 // pred_region
      _
    $region9: #{tpu_custom_call.1} parent=1 // pred_fallthru
      _
    // Predicated region
    $region10: #{tpu_custom_call.1} parent=1 // pred_check
      _
    $region11: #{tpu_custom_call.1} parent=1 // pred_check_branch
      %24 = sbr.rel (0) target = $region13
    $region12: #{tpu_custom_call.1} parent=1 // pred_region
      _
    $region13: #{tpu_custom_call.1} parent=1 // pred_fallthru
      _
    // Predicated region
    $region14: #{tpu_custom_call.1} parent=1 // pred_check
      _
    $region15: #{tpu_custom_call.1} parent=1 // pred_check_branch
      %26 = sbr.rel (0) target = $region17
    $region16: #{tpu_custom_call.1} parent=1 // pred_region
      _
    $region17: #{tpu_custom_call.1} parent=1 // pred_fallthru
      _
    // Predicated region
    $region18: #{tpu_custom_call.1} parent=1 // pred_check
      _
    $region19: #{tpu_custom_call.1} parent=1 // pred_check_branch
      %28 = sbr.rel (0) target = $region21
    $region20: #{tpu_custom_call.1} parent=1 // pred_region
      _
    $region21: #{tpu_custom_call.1} parent=1 // pred_fallthru
      _
    // Predicated region
    $region22: #{tpu_custom_call.1} parent=1 // pred_check
      _
    $region23: #{tpu_custom_call.1} parent=1 // pred_check_branch
      %30 = sbr.rel (0) target = $region25
    $region24: #{tpu_custom_call.1} parent=1 // pred_region
      _
    $region25: #{tpu_custom_call.1} parent=1 // pred_fallthru
      _
    %vm32 = vcmask 261120
    %33 = vst.msk [vmem:[#allocation2] sm:$0xff] %vm32, 0
    %34 = vst.msk [vmem:[#allocation2 + $0x8] sm:$0xff] %vm32, 0
    %s35 = smul.u32 0, 2
    %s36 = smul.u32 %s35, 128
    %s37 = sld [smem:[#allocation4 + %s36]]
    %s38 = scalar_lea.vmem %s1, %s37
    %v39 = vld [vmem:[%s38] sm:$0x1]
    %v42 = vunpack.c.l.s4 1966171168
    %v43 = vunpack.c.0.s8 %v42
    %v44 = vlaneseq
    %v45 = vshrl.u32 %v44, 7
    %v46 = vsub.s32 %v43, %v45
    %v47 = vrot.slane %v39, %v46
    %v48 = vcombine.low %v47, %v47
    %v50 = vunpack.c.l.s4 1966171168
    %v51 = vunpack.c.0.s8 %v50
    %v52 = vlaneseq
    %v53 = vshrl.u32 %v52, 7
    %v54 = vsub.s32 %v51, %v53
    %v55 = vrot.slane %v48, %v54
    %vm57 = vcmask 256002
    %vm58 = vsmask.f32 2304
    %vm59 = vmand %vm57, %vm58
    %v60 = vld [vmem:[#allocation2] sm:$0x4]
    %v61 = vsel %vm59, %v55, %v60
    %62 = vst [vmem:[#allocation2] sm:$0x4] %v61
    %s63 = sadd.s32 %s36, 1
    %s64 = sld [smem:[#allocation4 + %s63]]
    %s65 = scalar_lea.vmem %s1, %s64
    %v66 = vld [vmem:[%s65] sm:$0x1]
    %v69 = vunpack.c.l.s4 1966171168
    %v70 = vunpack.c.0.s8 %v69
    %v71 = vlaneseq
    %v72 = vshrl.u32 %v71, 7
    %v73 = vsub.s32 %v70, %v72
    %v74 = vrot.slane %v66, %v73
    %v76 = vunpack.c.l.s4 1966171168
    %v77 = vunpack.c.0.s8 %v76
    %v78 = vlaneseq
    %v79 = vshrl.u32 %v78, 7
    %v80 = vsub.s32 %v77, %v79
    %v81 = vrot.slane %v74, %v80
    %v83 = vshll.u32 %v81, 16
    %v85 = vrot.slane %v83, 6
    %vm87 = vsmask.f32 7946
    %vm88 = vmand %vm57, %vm87
    %v89 = vld [vmem:[#allocation2] sm:$0x4]
    %v90 = vsel %vm88, %v85, %v89
    %91 = vst [vmem:[#allocation2] sm:$0x4] %v90
    %s92 = sadd.s32 %s36, 2
    %s93 = sld [smem:[#allocation4 + %s92]]
    %s94 = scalar_lea.vmem %s1, %s93
    %v95 = vld [vmem:[%s94] sm:$0x1]
    %v97 = vcombine.low %v95, %v95
    %v99 = vunpack.c.l.s4 1966171168
    %v100 = vunpack.c.0.s8 %v99
    %v101 = vlaneseq
    %v102 = vshrl.u32 %v101, 7
    %v103 = vsub.s32 %v100, %v102
    %v104 = vrot.slane %v97, %v103
    %v105 = vcombine.low %v104, %v104
    %v107 = vunpack.c.l.s4 1966171168
    %v108 = vunpack.c.0.s8 %v107
    %v109 = vlaneseq
    %v110 = vshrl.u32 %v109, 7
    %v111 = vsub.s32 %v108, %v110
    %v112 = vrot.slane %v105, %v111
    %vm114 = vcmask 257027
    %vm115 = vsmask.f32 3328
    %vm116 = vmand %vm114, %vm115
    %v117 = vld [vmem:[#allocation2] sm:$0x8]
    %v118 = vsel %vm116, %v112, %v117
    %119 = vst [vmem:[#allocation2] sm:$0x8] %v118
    %s120 = sadd.s32 %s36, 3
    %s121 = sld [smem:[#allocation4 + %s120]]
    %s122 = scalar_lea.vmem %s1, %s121
    %v123 = vld [vmem:[%s122] sm:$0x1]
    %v126 = vunpack.c.l.s4 1966171168
    %v127 = vunpack.c.0.s8 %v126
    %v128 = vlaneseq
    %v129 = vshrl.u32 %v128, 7
    %v130 = vsub.s32 %v127, %v129
    %v131 = vrot.slane %v123, %v130
    %v133 = vunpack.c.l.s4 1966171168
    %v134 = vunpack.c.0.s8 %v133
    %v135 = vlaneseq
    %v136 = vshrl.u32 %v135, 7
    %v137 = vsub.s32 %v134, %v136
    %v138 = vrot.slane %v131, %v137
    %v140 = vshll.u32 %v138, 16
    %v142 = vrot.slane %v140, 5
    %vm144 = vsmask.f32 7950
    %vm145 = vmand %vm114, %vm144
    %v146 = vld [vmem:[#allocation2] sm:$0x8]
    %v147 = vsel %vm145, %v142, %v146
    %148 = vst [vmem:[#allocation2] sm:$0x8] %v147
    %s149 = sadd.s32 %s36, 4
    %s150 = sld [smem:[#allocation4 + %s149]]
    %s151 = scalar_lea.vmem %s1, %s150
    %v152 = vld [vmem:[%s151] sm:$0x1]
    %v155 = vunpack.c.l.s4 1966171168
    %v156 = vunpack.c.0.s8 %v155
    %v157 = vlaneseq
    %v158 = vshrl.u32 %v157, 7
    %v159 = vsub.s32 %v156, %v158
    %v160 = vrot.slane %v152, %v159
    %v162 = vunpack.c.l.s4 1966171168
    %v163 = vunpack.c.0.s8 %v162
    %v164 = vlaneseq
    %v165 = vshrl.u32 %v164, 7
    %v166 = vsub.s32 %v163, %v165
    %v167 = vrot.slane %v160, %v166
    %v168 = vcombine.low %v167, %v167
    %vm170 = vcmask 258052
    %vm171 = vsmask.f32 4352
    %vm172 = vmand %vm170, %vm171
    %v173 = vld [vmem:[#allocation2] sm:$0x10]
    %v174 = vsel %vm172, %v168, %v173
    %175 = vst [vmem:[#allocation2] sm:$0x10] %v174
    %s176 = sadd.s32 %s36, 5
    %s177 = sld [smem:[#allocation4 + %s176]]
    %s178 = scalar_lea.vmem %s1, %s177
    %v179 = vld [vmem:[%s178] sm:$0x1]
    %v182 = vunpack.c.l.s4 1966171168
    %v183 = vunpack.c.0.s8 %v182
    %v184 = vlaneseq
    %v185 = vshrl.u32 %v184, 7
    %v186 = vsub.s32 %v183, %v185
    %v187 = vrot.slane %v179, %v186
    %v189 = vunpack.c.l.s4 1966171168
    %v190 = vunpack.c.0.s8 %v189
    %v191 = vlaneseq
    %v192 = vshrl.u32 %v191, 7
    %v193 = vsub.s32 %v190, %v192
    %v194 = vrot.slane %v187, %v193
    %v196 = vshll.u32 %v194, 16
    %v198 = vrot.slane %v196, 4
    %vm200 = vsmask.f32 7954
    %vm201 = vmand %vm170, %vm200
    %v202 = vld [vmem:[#allocation2] sm:$0x10]
    %v203 = vsel %vm201, %v198, %v202
    %204 = vst [vmem:[#allocation2] sm:$0x10] %v203
    %s205 = sadd.s32 %s36, 6
    %s206 = sld [smem:[#allocation4 + %s205]]
    %s207 = scalar_lea.vmem %s1, %s206
    %v208 = vld [vmem:[%s207] sm:$0x1]
    %v210 = vcombine.low %v208, %v208
    %v212 = vunpack.c.l.s4 1966171168
    %v213 = vunpack.c.0.s8 %v212
    %v214 = vlaneseq
    %v215 = vshrl.u32 %v214, 7
    %v216 = vsub.s32 %v213, %v215
    %v217 = vrot.slane %v210, %v216
    %v219 = vunpack.c.l.s4 1966171168
    %v220 = vunpack.c.0.s8 %v219
    %v221 = vlaneseq
    %v222 = vshrl.u32 %v221, 7
    %v223 = vsub.s32 %v220, %v222
    %v224 = vrot.slane %v217, %v223
    %v225 = vcombine.low %v224, %v224
    %vm227 = vcmask 259077
    %vm228 = vsmask.f32 5376
    %vm229 = vmand %vm227, %vm228
    %v230 = vld [vmem:[#allocation2] sm:$0x20]
    %v231 = vsel %vm229, %v225, %v230
    %232 = vst [vmem:[#allocation2] sm:$0x20] %v231
    %s233 = sadd.s32 %s36, 7
    %s234 = sld [smem:[#allocation4 + %s233]]
    %s235 = scalar_lea.vmem %s1, %s234
    %v236 = vld [vmem:[%s235] sm:$0x1]
    %v239 = vunpack.c.l.s4 1966171168
    %v240 = vunpack.c.0.s8 %v239
    %v241 = vlaneseq
    %v242 = vshrl.u32 %v241, 7
    %v243 = vsub.s32 %v240, %v242
    %v244 = vrot.slane %v236, %v243
    %v246 = vunpack.c.l.s4 1966171168
    %v247 = vunpack.c.0.s8 %v246
    %v248 = vlaneseq
    %v249 = vshrl.u32 %v248, 7
    %v250 = vsub.s32 %v247, %v249
    %v251 = vrot.slane %v244, %v250
    %v253 = vshll.u32 %v251, 16
    %v255 = vrot.slane %v253, 3
    %vm257 = vsmask.f32 7958
    %vm258 = vmand %vm227, %vm257
    %v259 = vld [vmem:[#allocation2] sm:$0x20]
    %v260 = vsel %vm258, %v255, %v259
    %261 = vst [vmem:[#allocation2] sm:$0x20] %v260
    %s262 = sadd.s32 %s35, 1
    %s263 = smul.u32 %s262, 128
    %s264 = sld [smem:[#allocation4 + %s263]]
    %s265 = scalar_lea.vmem %s1, %s264
    %v266 = vld [vmem:[%s265] sm:$0x1]
    %v269 = vunpack.c.l.s4 1966171168
    %v270 = vunpack.c.0.s8 %v269
    %v271 = vlaneseq
    %v272 = vshrl.u32 %v271, 7
    %v273 = vsub.s32 %v270, %v272
    %v274 = vrot.slane %v266, %v273
    %v275 = vcombine.low %v274, %v274
    %v277 = vunpack.c.l.s4 1966171168
    %v278 = vunpack.c.0.s8 %v277
    %v279 = vlaneseq
    %v280 = vshrl.u32 %v279, 7
    %v281 = vsub.s32 %v278, %v280
    %v282 = vrot.slane %v275, %v281
    %s284 = scalar_lea.vmem [#allocation2], 8
    %v285 = vld [vmem:[%s284] sm:$0x4]
    %v286 = vsel %vm59, %v282, %v285
    %287 = vst [vmem:[%s284] sm:$0x4] %v286
    %s288 = sadd.s32 %s263, 1
    %s289 = sld [smem:[#allocation4 + %s288]]
    %s290 = scalar_lea.vmem %s1, %s289
    %v291 = vld [vmem:[%s290] sm:$0x1]
    %v294 = vunpack.c.l.s4 1966171168
    %v295 = vunpack.c.0.s8 %v294
    %v296 = vlaneseq
    %v297 = vshrl.u32 %v296, 7
    %v298 = vsub.s32 %v295, %v297
    %v299 = vrot.slane %v291, %v298
    %v301 = vunpack.c.l.s4 1966171168
    %v302 = vunpack.c.0.s8 %v301
    %v303 = vlaneseq
    %v304 = vshrl.u32 %v303, 7
    %v305 = vsub.s32 %v302, %v304
    %v306 = vrot.slane %v299, %v305
    %v308 = vshll.u32 %v306, 16
    %v310 = vrot.slane %v308, 6
    %v312 = vld [vmem:[%s284] sm:$0x4]
    %v313 = vsel %vm88, %v310, %v312
    %314 = vst [vmem:[%s284] sm:$0x4] %v313
    %s315 = sadd.s32 %s263, 2
    %s316 = sld [smem:[#allocation4 + %s315]]
    %s317 = scalar_lea.vmem %s1, %s316
    %v318 = vld [vmem:[%s317] sm:$0x1]
    %v320 = vcombine.low %v318, %v318
    %v322 = vunpack.c.l.s4 1966171168
    %v323 = vunpack.c.0.s8 %v322
    %v324 = vlaneseq
    %v325 = vshrl.u32 %v324, 7
    %v326 = vsub.s32 %v323, %v325
    %v327 = vrot.slane %v320, %v326
    %v328 = vcombine.low %v327, %v327
    %v330 = vunpack.c.l.s4 1966171168
    %v331 = vunpack.c.0.s8 %v330
    %v332 = vlaneseq
    %v333 = vshrl.u32 %v332, 7
    %v334 = vsub.s32 %v331, %v333
    %v335 = vrot.slane %v328, %v334
    %v337 = vld [vmem:[%s284] sm:$0x8]
    %v338 = vsel %vm116, %v335, %v337
    %339 = vst [vmem:[%s284] sm:$0x8] %v338
    %s340 = sadd.s32 %s263, 3
    %s341 = sld [smem:[#allocation4 + %s340]]
    %s342 = scalar_lea.vmem %s1, %s341
    %v343 = vld [vmem:[%s342] sm:$0x1]
    %v346 = vunpack.c.l.s4 1966171168
    %v347 = vunpack.c.0.s8 %v346
    %v348 = vlaneseq
    %v349 = vshrl.u32 %v348, 7
    %v350 = vsub.s32 %v347, %v349
    %v351 = vrot.slane %v343, %v350
    %v353 = vunpack.c.l.s4 1966171168
    %v354 = vunpack.c.0.s8 %v353
    %v355 = vlaneseq
    %v356 = vshrl.u32 %v355, 7
    %v357 = vsub.s32 %v354, %v356
    %v358 = vrot.slane %v351, %v357
    %v360 = vshll.u32 %v358, 16
    %v362 = vrot.slane %v360, 5
    %v364 = vld [vmem:[%s284] sm:$0x8]
    %v365 = vsel %vm145, %v362, %v364
    %366 = vst [vmem:[%s284] sm:$0x8] %v365
    %s367 = sadd.s32 %s263, 4
    %s368 = sld [smem:[#allocation4 + %s367]]
    %s369 = scalar_lea.vmem %s1, %s368
    %v370 = vld [vmem:[%s369] sm:$0x1]
    %v373 = vunpack.c.l.s4 1966171168
    %v374 = vunpack.c.0.s8 %v373
    %v375 = vlaneseq
    %v376 = vshrl.u32 %v375, 7
    %v377 = vsub.s32 %v374, %v376
    %v378 = vrot.slane %v370, %v377
    %v380 = vunpack.c.l.s4 1966171168
    %v381 = vunpack.c.0.s8 %v380
    %v382 = vlaneseq
    %v383 = vshrl.u32 %v382, 7
    %v384 = vsub.s32 %v381, %v383
    %v385 = vrot.slane %v378, %v384
    %v386 = vcombine.low %v385, %v385
    %v388 = vld [vmem:[%s284] sm:$0x10]
    %v389 = vsel %vm172, %v386, %v388
    %390 = vst [vmem:[%s284] sm:$0x10] %v389
    %s391 = sadd.s32 %s263, 5
    %s392 = sld [smem:[#allocation4 + %s391]]
    %s393 = scalar_lea.vmem %s1, %s392
    %v394 = vld [vmem:[%s393] sm:$0x1]
    %v397 = vunpack.c.l.s4 1966171168
    %v398 = vunpack.c.0.s8 %v397
    %v399 = vlaneseq
    %v400 = vshrl.u32 %v399, 7
    %v401 = vsub.s32 %v398, %v400
    %v402 = vrot.slane %v394, %v401
    %v404 = vunpack.c.l.s4 1966171168
    %v405 = vunpack.c.0.s8 %v404
    %v406 = vlaneseq
    %v407 = vshrl.u32 %v406, 7
    %v408 = vsub.s32 %v405, %v407
    %v409 = vrot.slane %v402, %v408
    %v411 = vshll.u32 %v409, 16
    %v413 = vrot.slane %v411, 4
    %v415 = vld [vmem:[%s284] sm:$0x10]
    %v416 = vsel %vm201, %v413, %v415
    %417 = vst [vmem:[%s284] sm:$0x10] %v416
    %s418 = sadd.s32 %s263, 6
    %s419 = sld [smem:[#allocation4 + %s418]]
    %s420 = scalar_lea.vmem %s1, %s419
    %v421 = vld [vmem:[%s420] sm:$0x1]
    %v423 = vcombine.low %v421, %v421
    %v425 = vunpack.c.l.s4 1966171168
    %v426 = vunpack.c.0.s8 %v425
    %v427 = vlaneseq
    %v428 = vshrl.u32 %v427, 7
    %v429 = vsub.s32 %v426, %v428
    %v430 = vrot.slane %v423, %v429
    %v432 = vunpack.c.l.s4 1966171168
    %v433 = vunpack.c.0.s8 %v432
    %v434 = vlaneseq
    %v435 = vshrl.u32 %v434, 7
    %v436 = vsub.s32 %v433, %v435
    %v437 = vrot.slane %v430, %v436
    %v438 = vcombine.low %v437, %v437
    %v440 = vld [vmem:[%s284] sm:$0x20]
    %v441 = vsel %vm229, %v438, %v440
    %442 = vst [vmem:[%s284] sm:$0x20] %v441
    %s443 = sadd.s32 %s263, 7
    %s444 = sld [smem:[#allocation4 + %s443]]
    %s445 = scalar_lea.vmem %s1, %s444
    %v446 = vld [vmem:[%s445] sm:$0x1]
    %v449 = vunpack.c.l.s4 1966171168
    %v450 = vunpack.c.0.s8 %v449
    %v451 = vlaneseq
    %v452 = vshrl.u32 %v451, 7
    %v453 = vsub.s32 %v450, %v452
    %v454 = vrot.slane %v446, %v453
    %v456 = vunpack.c.l.s4 1966171168
    %v457 = vunpack.c.0.s8 %v456
    %v458 = vlaneseq
    %v459 = vshrl.u32 %v458, 7
    %v460 = vsub.s32 %v457, %v459
    %v461 = vrot.slane %v454, %v460
    %v463 = vshll.u32 %v461, 16
    %v465 = vrot.slane %v463, 3
    %v467 = vld [vmem:[%s284] sm:$0x20]
    %v468 = vsel %vm258, %v465, %v467
    %469 = vst [vmem:[%s284] sm:$0x20] %v468
    %v470 = vld [vmem:[#allocation2] sm:$0x3f]
    %v471 = vld [vmem:[#allocation2 + $0x8] sm:$0x3f]
    %v472 = vld [vmem:[%s2] sm:$0xf]
    %v473 = vld [vmem:[%s2 + $0x4] sm:$0xf]
    %v474 = vld [vmem:[%s2 + $0x8] sm:$0xf]
    %v475 = vld [vmem:[%s2 + $0xc] sm:$0xf]
    %v476 = vld [vmem:[#allocation2] sm:$0x7f]
    %v477 = vld [vmem:[#allocation2 + $0x8] sm:$0x7f]
    %s478 = scalar_lea.vmem %s2, 16
    %v479 = vld [vmem:[%s478] sm:$0xf]
    %v480 = vld [vmem:[%s478 + $0x4] sm:$0xf]
    %v481 = vld [vmem:[%s478 + $0x8] sm:$0xf]
    %v482 = vld [vmem:[%s478 + $0xc] sm:$0xf]
    %v485 = vcombine.high %v476, %v476
    %v487 = vunpack.c.l.s4 1983009808
    %v488 = vunpack.c.0.s8 %v487
    %v489 = vlaneseq
    %v490 = vshrl.u32 %v489, 7
    %v491 = vsub.s32 %v488, %v490
    %v492 = vrot.slane %v476, %v491
    %v494 = vunpack.c.l.s4 1983009808
    %v495 = vunpack.c.0.s8 %v494
    %v496 = vlaneseq
    %v497 = vshrl.u32 %v496, 7
    %v498 = vsub.s32 %v495, %v497
    %v499 = vrot.slane %v485, %v498
    %v500 = vcombine.high %v492, %v492
    %v501 = vcombine.high %v499, %v499
    %v502 = vcombine.high %v477, %v477
    %v504 = vunpack.c.l.s4 1983009808
    %v505 = vunpack.c.0.s8 %v504
    %v506 = vlaneseq
    %v507 = vshrl.u32 %v506, 7
    %v508 = vsub.s32 %v505, %v507
    %v509 = vrot.slane %v477, %v508
    %v511 = vunpack.c.l.s4 1983009808
    %v512 = vunpack.c.0.s8 %v511
    %v513 = vlaneseq
    %v514 = vshrl.u32 %v513, 7
    %v515 = vsub.s32 %v512, %v514
    %v516 = vrot.slane %v502, %v515
    %v517 = vcombine.high %v509, %v509
    %v518 = vcombine.high %v516, %v516
    %vm519 = vsmask.f32 1280
    %vm520 = vsmask.f32 3336
    %vm521 = vmor %vm519, %vm520
    %vm522 = vsmask.f32 5392
    %vm523 = vmor %vm521, %vm522
    %vm524 = vsmask.f32 7448
    %vm525 = vmor %vm523, %vm524
    %v527 = vshrl.u32 %v492, 16
    %v529 = vrot.slane %v527, 6
    %v530 = vshll.u32 %v492, 16
    %v532 = vrot.slane %v530, 7
    %v533 = vor.u32 %v529, %v532
    %v534 = vrot.slane %v533, 2
    %v536 = vshll.u32 %v500, 16
    %v538 = vrot.slane %v536, 7
    %v539 = vsel %vm525, %v534, %v538
    %v540 = vshrl.u32 %v500, 16
    %v542 = vrot.slane %v540, 6
    %v543 = vor.u32 %v542, %v538
    %v544 = vrot.slane %v543, 2
    %v546 = vshll.u32 %v499, 16
    %v548 = vrot.slane %v546, 7
    %v549 = vsel %vm525, %v544, %v548
    %v550 = vshrl.u32 %v499, 16
    %v552 = vrot.slane %v550, 6
    %v553 = vor.u32 %v552, %v548
    %v554 = vrot.slane %v553, 2
    %v556 = vshll.u32 %v501, 16
    %v558 = vrot.slane %v556, 7
    %v559 = vsel %vm525, %v554, %v558
    %v561 = vshrl.u32 %v509, 16
    %v563 = vrot.slane %v561, 6
    %v564 = vshll.u32 %v509, 16
    %v566 = vrot.slane %v564, 7
    %v567 = vor.u32 %v563, %v566
    %v568 = vrot.slane %v567, 2
    %v570 = vshll.u32 %v517, 16
    %v572 = vrot.slane %v570, 7
    %v573 = vsel %vm525, %v568, %v572
    %v574 = vshrl.u32 %v517, 16
    %v576 = vrot.slane %v574, 6
    %v577 = vor.u32 %v576, %v572
    %v578 = vrot.slane %v577, 2
    %v580 = vshll.u32 %v516, 16
    %v582 = vrot.slane %v580, 7
    %v583 = vsel %vm525, %v578, %v582
    %v584 = vshrl.u32 %v516, 16
    %v586 = vrot.slane %v584, 6
    %v587 = vor.u32 %v586, %v582
    %v588 = vrot.slane %v587, 2
    %v590 = vshll.u32 %v518, 16
    %v592 = vrot.slane %v590, 7
    %v593 = vsel %vm525, %v588, %v592
    %v594 = vcombine.low %v539, %v549
    %v595 = vcombine.low %v559, %v573
    %v597 = vunpack.c.l.s4 1983009808
    %v598 = vunpack.c.0.s8 %v597
    %v599 = vlaneseq
    %v600 = vshrl.u32 %v599, 7
    %v601 = vsub.s32 %v598, %v600
    %v602 = vrot.slane %v594, %v601
    %v604 = vunpack.c.l.s4 1983009808
    %v605 = vunpack.c.0.s8 %v604
    %v606 = vlaneseq
    %v607 = vshrl.u32 %v606, 7
    %v608 = vsub.s32 %v605, %v607
    %v609 = vrot.slane %v595, %v608
    %v610 = vcombine.low %v602, %v609
    %v611 = vcombine.low %v583, %v593
    %v613 = vunpack.c.l.s4 1983009808
    %v614 = vunpack.c.0.s8 %v613
    %v615 = vlaneseq
    %v616 = vshrl.u32 %v615, 7
    %v617 = vsub.s32 %v614, %v616
    %v618 = vrot.slane %v611, %v617
    %v623 = vunpack.c.l.b16 %v479
    %v624 = vunpack.c.l.b16 %v480
    %v625 = vunpack.c.l.b16 %v481
    %v626 = vunpack.c.l.b16 %v482
    %v627 = vpack.c.b16 %v624, %v623
    %v628 = vpack.c.b16 %v626, %v625
    %v632 = vsel %vm32, %v610, 0
    %v635 = vsel %vm32, %v618, 0
    %637 = vmatprep.subr.bf16.mxu0 0
    %638 = vmatpush1.bf16.msra.mxu0 %v627
    %639 = vmatprep.subr.bf16.mxu0 0
    %640 = vmatpush1.bf16.msra.mxu0 %v628
    %641 = vmatprep.subr.bf16.mxu0 0
    %642 = vmatpush1.bf16.msra.mxu0 0
    %643 = vmatprep.subr.bf16.mxu0 0
    %644 = vmatpush1.bf16.msra.mxu0 0
    %645 = vmatprep.subr.bf16.mxu0 0
    %646 = vmatpush1.bf16.msra.mxu0 0
    %647 = vmatprep.subr.bf16.mxu0 0
    %648 = vmatpush1.bf16.msra.mxu0 0
    %649 = vmatprep.subr.bf16.mxu0 0
    %650 = vmatpush1.bf16.msra.mxu0 0
    %651 = vmatprep.subr.bf16.mxu0 0
    %652 = vmatpush1.bf16.msra.mxu0 0
    %653 = vmatprep.subr.bf16.mxu0 0
    %654 = vmatpush1.bf16.msra.mxu0 0
    %655 = vmatprep.subr.bf16.mxu0 0
    %656 = vmatpush1.bf16.msra.mxu0 0
    %657 = vmatprep.subr.bf16.mxu0 0
    %658 = vmatpush1.bf16.msra.mxu0 0
    %659 = vmatprep.subr.bf16.mxu0 0
    %660 = vmatpush1.bf16.msra.mxu0 0
    %661 = vmatprep.subr.bf16.mxu0 0
    %662 = vmatpush1.bf16.msra.mxu0 0
    %663 = vmatprep.subr.bf16.mxu0 0
    %664 = vmatpush1.bf16.msra.mxu0 0
    %665 = vmatprep.subr.bf16.mxu0 0
    %666 = vmatpush1.bf16.msra.mxu0 0
    %667 = vmatprep.subr.bf16.mxu0 0
    %668 = vmatpush1.bf16.msra.mxu0 0
    %669 = vmatprep.mubr.bf16.mxu0 0
    %670 = vmatmul.mubr.bf16.gmra.mrb[0].mxu0 %v632
    %v671 = vpop.f32.mrb[0].mxu0
    %v672 = vadd.f32 0.0, %v671
    %v673 = vpop.f32.mrb[0].mxu0
    %v674 = vpop.f32.mrb[0].mxu0
    %v675 = vadd.f32 0.0, %v674
    %v676 = vpop.f32.mrb[0].mxu0
    %677 = vmatprep.mubr.bf16.mxu0 0
    %678 = vmatmul.mubr.bf16.gmra.mrb[0].mxu0 %v635
    %v679 = vpop.f32.mrb[0].mxu0
    %v680 = vadd.f32 0.0, %v679
    %v681 = vpop.f32.mrb[0].mxu0
    %v682 = vpop.f32.mrb[0].mxu0
    %v683 = vpop.f32.mrb[0].mxu0
    %684 = vdwg.mxu0
    %v687 = vcombine.high %v470, %v470
    %v689 = vunpack.c.l.s4 1983009808
    %v690 = vunpack.c.0.s8 %v689
    %v691 = vlaneseq
    %v692 = vshrl.u32 %v691, 7
    %v693 = vsub.s32 %v690, %v692
    %v694 = vrot.slane %v470, %v693
    %v696 = vunpack.c.l.s4 1983009808
    %v697 = vunpack.c.0.s8 %v696
    %v698 = vlaneseq
    %v699 = vshrl.u32 %v698, 7
    %v700 = vsub.s32 %v697, %v699
    %v701 = vrot.slane %v687, %v700
    %v702 = vcombine.high %v694, %v694
    %v703 = vcombine.high %v471, %v471
    %v705 = vunpack.c.l.s4 1983009808
    %v706 = vunpack.c.0.s8 %v705
    %v707 = vlaneseq
    %v708 = vshrl.u32 %v707, 7
    %v709 = vsub.s32 %v706, %v708
    %v710 = vrot.slane %v471, %v709
    %v712 = vunpack.c.l.s4 1983009808
    %v713 = vunpack.c.0.s8 %v712
    %v714 = vlaneseq
    %v715 = vshrl.u32 %v714, 7
    %v716 = vsub.s32 %v713, %v715
    %v717 = vrot.slane %v703, %v716
    %v718 = vcombine.high %v710, %v710
    %v719 = vcombine.low %v694, %v702
    %v720 = vcombine.low %v701, %v710
    %v722 = vunpack.c.l.s4 1983009808
    %v723 = vunpack.c.0.s8 %v722
    %v724 = vlaneseq
    %v725 = vshrl.u32 %v724, 7
    %v726 = vsub.s32 %v723, %v725
    %v727 = vrot.slane %v719, %v726
    %v729 = vunpack.c.l.s4 1983009808
    %v730 = vunpack.c.0.s8 %v729
    %v731 = vlaneseq
    %v732 = vshrl.u32 %v731, 7
    %v733 = vsub.s32 %v730, %v732
    %v734 = vrot.slane %v720, %v733
    %v735 = vcombine.low %v727, %v734
    %v736 = vcombine.low %v718, %v717
    %v738 = vunpack.c.l.s4 1983009808
    %v739 = vunpack.c.0.s8 %v738
    %v740 = vlaneseq
    %v741 = vshrl.u32 %v740, 7
    %v742 = vsub.s32 %v739, %v741
    %v743 = vrot.slane %v736, %v742
    %v748 = vunpack.c.l.b16 %v472
    %v749 = vunpack.c.l.b16 %v473
    %v750 = vunpack.c.l.b16 %v474
    %v751 = vunpack.c.l.b16 %v475
    %v752 = vpack.c.b16 %v749, %v748
    %v753 = vpack.c.b16 %v751, %v750
    %v757 = vsel %vm32, %v735, 0
    %v760 = vsel %vm32, %v743, 0
    %762 = vmatprep.subr.bf16.mxu0 0
    %763 = vmatpush1.bf16.msra.mxu0 %v752
    %764 = vmatprep.subr.bf16.mxu0 0
    %765 = vmatpush1.bf16.msra.mxu0 %v753
    %766 = vmatprep.subr.bf16.mxu0 0
    %767 = vmatpush1.bf16.msra.mxu0 0
    %768 = vmatprep.subr.bf16.mxu0 0
    %769 = vmatpush1.bf16.msra.mxu0 0
    %770 = vmatprep.subr.bf16.mxu0 0
    %771 = vmatpush1.bf16.msra.mxu0 0
    %772 = vmatprep.subr.bf16.mxu0 0
    %773 = vmatpush1.bf16.msra.mxu0 0
    %774 = vmatprep.subr.bf16.mxu0 0
    %775 = vmatpush1.bf16.msra.mxu0 0
    %776 = vmatprep.subr.bf16.mxu0 0
    %777 = vmatpush1.bf16.msra.mxu0 0
    %778 = vmatprep.subr.bf16.mxu0 0
    %779 = vmatpush1.bf16.msra.mxu0 0
    %780 = vmatprep.subr.bf16.mxu0 0
    %781 = vmatpush1.bf16.msra.mxu0 0
    %782 = vmatprep.subr.bf16.mxu0 0
    %783 = vmatpush1.bf16.msra.mxu0 0
    %784 = vmatprep.subr.bf16.mxu0 0
    %785 = vmatpush1.bf16.msra.mxu0 0
    %786 = vmatprep.subr.bf16.mxu0 0
    %787 = vmatpush1.bf16.msra.mxu0 0
    %788 = vmatprep.subr.bf16.mxu0 0
    %789 = vmatpush1.bf16.msra.mxu0 0
    %790 = vmatprep.subr.bf16.mxu0 0
    %791 = vmatpush1.bf16.msra.mxu0 0
    %792 = vmatprep.subr.bf16.mxu0 0
    %793 = vmatpush1.bf16.msra.mxu0 0
    %794 = vmatprep.mubr.bf16.mxu0 0
    %795 = vmatmul.mubr.bf16.gmra.mrb[0].mxu0 %v757
    %v796 = vpop.f32.mrb[0].mxu0
    %v797 = vadd.f32 %v672, %v796
    %v798 = vpop.f32.mrb[0].mxu0
    %v799 = vpop.f32.mrb[0].mxu0
    %v800 = vadd.f32 %v675, %v799
    %v801 = vpop.f32.mrb[0].mxu0
    %802 = vmatprep.mubr.bf16.mxu0 0
    %803 = vmatmul.mubr.bf16.gmra.mrb[0].mxu0 %v760
    %v804 = vpop.f32.mrb[0].mxu0
    %v805 = vadd.f32 %v680, %v804
    %v806 = vpop.f32.mrb[0].mxu0
    %v807 = vpop.f32.mrb[0].mxu0
    %v808 = vpop.f32.mrb[0].mxu0
    %809 = vdwg.mxu0
    %v813 = vcombine.high %v797, %v797
    %v814 = vcombine.high %v800, %v800
    %v815 = vcombine.high %v805, %v805
    %v819 = vld [vmem:[#allocation2] sm:$0x7e]
    %v820 = vld [vmem:[#allocation2 + $0x8] sm:$0x7e]
    %s821 = scalar_lea.vmem %s2, 32
    %v822 = vld [vmem:[%s821] sm:$0xf]
    %v823 = vld [vmem:[%s821 + $0x4] sm:$0xf]
    %v824 = vld [vmem:[%s821 + $0x8] sm:$0xf]
    %v825 = vld [vmem:[%s821 + $0xc] sm:$0xf]
    %v828 = vcombine.high %v819, %v819
    %v830 = vunpack.c.l.s4 1983009808
    %v831 = vunpack.c.0.s8 %v830
    %v832 = vlaneseq
    %v833 = vshrl.u32 %v832, 7
    %v834 = vsub.s32 %v831, %v833
    %v835 = vrot.slane %v819, %v834
    %v837 = vunpack.c.l.s4 1983009808
    %v838 = vunpack.c.0.s8 %v837
    %v839 = vlaneseq
    %v840 = vshrl.u32 %v839, 7
    %v841 = vsub.s32 %v838, %v840
    %v842 = vrot.slane %v828, %v841
    %v843 = vcombine.high %v835, %v835
    %v844 = vcombine.high %v842, %v842
    %v845 = vcombine.high %v820, %v820
    %v847 = vunpack.c.l.s4 1983009808
    %v848 = vunpack.c.0.s8 %v847
    %v849 = vlaneseq
    %v850 = vshrl.u32 %v849, 7
    %v851 = vsub.s32 %v848, %v850
    %v852 = vrot.slane %v820, %v851
    %v854 = vunpack.c.l.s4 1983009808
    %v855 = vunpack.c.0.s8 %v854
    %v856 = vlaneseq
    %v857 = vshrl.u32 %v856, 7
    %v858 = vsub.s32 %v855, %v857
    %v859 = vrot.slane %v845, %v858
    %v860 = vcombine.high %v852, %v852
    %v861 = vcombine.high %v859, %v859
    %vm862 = vcmask 1040384
    %vm863 = vcmask 1042434
    %vm864 = vmor %vm862, %vm863
    %vm865 = vcmask 1044484
    %vm866 = vmor %vm864, %vm865
    %vm867 = vcmask 1046534
    %vm868 = vmor %vm866, %vm867
    %v869 = vrot.slane %v835, 7
    %v870 = vrot.slane %v869, 2
    %v871 = vrot.slane %v843, 7
    %v872 = vsel %vm868, %v870, %v871
    %v873 = vrot.slane %v871, 2
    %v874 = vrot.slane %v842, 7
    %v875 = vsel %vm868, %v873, %v874
    %v876 = vrot.slane %v874, 2
    %v877 = vrot.slane %v844, 7
    %v878 = vsel %vm868, %v876, %v877
    %v879 = vrot.slane %v852, 7
    %v880 = vrot.slane %v879, 2
    %v881 = vrot.slane %v860, 7
    %v882 = vsel %vm868, %v880, %v881
    %v883 = vrot.slane %v881, 2
    %v884 = vrot.slane %v859, 7
    %v885 = vsel %vm868, %v883, %v884
    %v886 = vrot.slane %v884, 2
    %v887 = vrot.slane %v861, 7
    %v888 = vsel %vm868, %v886, %v887
    %v889 = vcombine.low %v872, %v875
    %v890 = vcombine.low %v878, %v882
    %v892 = vunpack.c.l.s4 1983009808
    %v893 = vunpack.c.0.s8 %v892
    %v894 = vlaneseq
    %v895 = vshrl.u32 %v894, 7
    %v896 = vsub.s32 %v893, %v895
    %v897 = vrot.slane %v889, %v896
    %v899 = vunpack.c.l.s4 1983009808
    %v900 = vunpack.c.0.s8 %v899
    %v901 = vlaneseq
    %v902 = vshrl.u32 %v901, 7
    %v903 = vsub.s32 %v900, %v902
    %v904 = vrot.slane %v890, %v903
    %v905 = vcombine.low %v897, %v904
    %v906 = vcombine.low %v885, %v888
    %v908 = vunpack.c.l.s4 1983009808
    %v909 = vunpack.c.0.s8 %v908
    %v910 = vlaneseq
    %v911 = vshrl.u32 %v910, 7
    %v912 = vsub.s32 %v909, %v911
    %v913 = vrot.slane %v906, %v912
    %v918 = vunpack.c.l.b16 %v822
    %v919 = vunpack.c.l.b16 %v823
    %v920 = vunpack.c.l.b16 %v824
    %v921 = vunpack.c.l.b16 %v825
    %v922 = vpack.c.b16 %v919, %v918
    %v923 = vpack.c.b16 %v921, %v920
    %v927 = vsel %vm32, %v905, 0
    %v930 = vsel %vm32, %v913, 0
    %932 = vmatprep.subr.bf16.mxu0 0
    %933 = vmatpush1.bf16.msra.mxu0 %v922
    %934 = vmatprep.subr.bf16.mxu0 0
    %935 = vmatpush1.bf16.msra.mxu0 %v923
    %936 = vmatprep.subr.bf16.mxu0 0
    %937 = vmatpush1.bf16.msra.mxu0 0
    %938 = vmatprep.subr.bf16.mxu0 0
    %939 = vmatpush1.bf16.msra.mxu0 0
    %940 = vmatprep.subr.bf16.mxu0 0
    %941 = vmatpush1.bf16.msra.mxu0 0
    %942 = vmatprep.subr.bf16.mxu0 0
    %943 = vmatpush1.bf16.msra.mxu0 0
    %944 = vmatprep.subr.bf16.mxu0 0
    %945 = vmatpush1.bf16.msra.mxu0 0
    %946 = vmatprep.subr.bf16.mxu0 0
    %947 = vmatpush1.bf16.msra.mxu0 0
    %948 = vmatprep.subr.bf16.mxu0 0
    %949 = vmatpush1.bf16.msra.mxu0 0
    %950 = vmatprep.subr.bf16.mxu0 0
    %951 = vmatpush1.bf16.msra.mxu0 0
    %952 = vmatprep.subr.bf16.mxu0 0
    %953 = vmatpush1.bf16.msra.mxu0 0
    %954 = vmatprep.subr.bf16.mxu0 0
    %955 = vmatpush1.bf16.msra.mxu0 0
    %956 = vmatprep.subr.bf16.mxu0 0
    %957 = vmatpush1.bf16.msra.mxu0 0
    %958 = vmatprep.subr.bf16.mxu0 0
    %959 = vmatpush1.bf16.msra.mxu0 0
    %960 = vmatprep.subr.bf16.mxu0 0
    %961 = vmatpush1.bf16.msra.mxu0 0
    %962 = vmatprep.subr.bf16.mxu0 0
    %963 = vmatpush1.bf16.msra.mxu0 0
    %964 = vmatprep.mubr.bf16.mxu0 0
    %965 = vmatmul.mubr.bf16.gmra.mrb[0].mxu0 %v927
    %v966 = vpop.f32.mrb[0].mxu0
    %v967 = vadd.f32 0.0, %v966
    %v968 = vpop.f32.mrb[0].mxu0
    %v969 = vpop.f32.mrb[0].mxu0
    %v970 = vadd.f32 0.0, %v969
    %v971 = vpop.f32.mrb[0].mxu0
    %972 = vmatprep.mubr.bf16.mxu0 0
    %973 = vmatmul.mubr.bf16.gmra.mrb[0].mxu0 %v930
    %v974 = vpop.f32.mrb[0].mxu0
    %v975 = vadd.f32 0.0, %v974
    %v976 = vpop.f32.mrb[0].mxu0
    %v977 = vpop.f32.mrb[0].mxu0
    %v978 = vpop.f32.mrb[0].mxu0
    %979 = vdwg.mxu0
    %v983 = vcombine.high %v967, %v967
    %v984 = vcombine.high %v970, %v970
    %v985 = vcombine.high %v975, %v975
    %v989 = vadd.f32 %v797, %v967
    %v990 = vadd.f32 %v813, %v983
    %v991 = vadd.f32 %v800, %v970
    %v992 = vadd.f32 %v814, %v984
    %v993 = vadd.f32 %v805, %v975
    %v994 = vadd.f32 %v815, %v985
    %v995 = vld [vmem:[#allocation2] sm:$0xfe]
    %v996 = vld [vmem:[#allocation2 + $0x8] sm:$0xfe]
    %s997 = scalar_lea.vmem %s2, 48
    %v998 = vld [vmem:[%s997] sm:$0xf]
    %v999 = vld [vmem:[%s997 + $0x4] sm:$0xf]
    %v1000 = vld [vmem:[%s997 + $0x8] sm:$0xf]
    %v1001 = vld [vmem:[%s997 + $0xc] sm:$0xf]
    %v1004 = vcombine.high %v995, %v995
    %v1006 = vunpack.c.l.s4 1983009808
    %v1007 = vunpack.c.0.s8 %v1006
    %v1008 = vlaneseq
    %v1009 = vshrl.u32 %v1008, 7
    %v1010 = vsub.s32 %v1007, %v1009
    %v1011 = vrot.slane %v995, %v1010
    %v1013 = vunpack.c.l.s4 1983009808
    %v1014 = vunpack.c.0.s8 %v1013
    %v1015 = vlaneseq
    %v1016 = vshrl.u32 %v1015, 7
    %v1017 = vsub.s32 %v1014, %v1016
    %v1018 = vrot.slane %v1004, %v1017
    %v1019 = vcombine.high %v1011, %v1011
    %v1020 = vcombine.high %v1018, %v1018
    %v1021 = vcombine.high %v996, %v996
    %v1023 = vunpack.c.l.s4 1983009808
    %v1024 = vunpack.c.0.s8 %v1023
    %v1025 = vlaneseq
    %v1026 = vshrl.u32 %v1025, 7
    %v1027 = vsub.s32 %v1024, %v1026
    %v1028 = vrot.slane %v996, %v1027
    %v1030 = vunpack.c.l.s4 1983009808
    %v1031 = vunpack.c.0.s8 %v1030
    %v1032 = vlaneseq
    %v1033 = vshrl.u32 %v1032, 7
    %v1034 = vsub.s32 %v1031, %v1033
    %v1035 = vrot.slane %v1021, %v1034
    %v1036 = vcombine.high %v1028, %v1028
    %v1037 = vcombine.high %v1035, %v1035
    %vm1038 = vsmask.f32 256
    %vm1039 = vsmask.f32 2312
    %vm1040 = vmor %vm1038, %vm1039
    %vm1041 = vsmask.f32 4368
    %vm1042 = vmor %vm1040, %vm1041
    %vm1043 = vsmask.f32 6424
    %vm1044 = vmor %vm1042, %vm1043
    %v1046 = vshrl.u32 %v1011, 16
    %v1048 = vrot.slane %v1046, 7
    %v1049 = vrot.slane %v1048, 2
    %v1051 = vshrl.u32 %v1019, 16
    %v1053 = vrot.slane %v1051, 7
    %v1054 = vshll.u32 %v1019, 16
    %v1056 = vor.u32 %v1053, %v1054
    %v1057 = vsel %vm1044, %v1049, %v1056
    %v1058 = vrot.slane %v1053, 2
    %v1060 = vshrl.u32 %v1018, 16
    %v1062 = vrot.slane %v1060, 7
    %v1063 = vshll.u32 %v1018, 16
    %v1065 = vor.u32 %v1062, %v1063
    %v1066 = vsel %vm1044, %v1058, %v1065
    %v1067 = vrot.slane %v1062, 2
    %v1069 = vshrl.u32 %v1020, 16
    %v1071 = vrot.slane %v1069, 7
    %v1072 = vshll.u32 %v1020, 16
    %v1074 = vor.u32 %v1071, %v1072
    %v1075 = vsel %vm1044, %v1067, %v1074
    %v1077 = vshrl.u32 %v1028, 16
    %v1079 = vrot.slane %v1077, 7
    %v1080 = vrot.slane %v1079, 2
    %v1082 = vshrl.u32 %v1036, 16
    %v1084 = vrot.slane %v1082, 7
    %v1085 = vshll.u32 %v1036, 16
    %v1087 = vor.u32 %v1084, %v1085
    %v1088 = vsel %vm1044, %v1080, %v1087
    %v1089 = vrot.slane %v1084, 2
    %v1091 = vshrl.u32 %v1035, 16
    %v1093 = vrot.slane %v1091, 7
    %v1094 = vshll.u32 %v1035, 16
    %v1096 = vor.u32 %v1093, %v1094
    %v1097 = vsel %vm1044, %v1089, %v1096
    %v1098 = vrot.slane %v1093, 2
    %v1100 = vshrl.u32 %v1037, 16
    %v1102 = vrot.slane %v1100, 7
    %v1103 = vshll.u32 %v1037, 16
    %v1105 = vor.u32 %v1102, %v1103
    %v1106 = vsel %vm1044, %v1098, %v1105
    %v1107 = vcombine.low %v1057, %v1066
    %v1108 = vcombine.low %v1075, %v1088
    %v1110 = vunpack.c.l.s4 1983009808
    %v1111 = vunpack.c.0.s8 %v1110
    %v1112 = vlaneseq
    %v1113 = vshrl.u32 %v1112, 7
    %v1114 = vsub.s32 %v1111, %v1113
    %v1115 = vrot.slane %v1107, %v1114
    %v1117 = vunpack.c.l.s4 1983009808
    %v1118 = vunpack.c.0.s8 %v1117
    %v1119 = vlaneseq
    %v1120 = vshrl.u32 %v1119, 7
    %v1121 = vsub.s32 %v1118, %v1120
    %v1122 = vrot.slane %v1108, %v1121
    %v1123 = vcombine.low %v1115, %v1122
    %v1124 = vcombine.low %v1097, %v1106
    %v1126 = vunpack.c.l.s4 1983009808
    %v1127 = vunpack.c.0.s8 %v1126
    %v1128 = vlaneseq
    %v1129 = vshrl.u32 %v1128, 7
    %v1130 = vsub.s32 %v1127, %v1129
    %v1131 = vrot.slane %v1124, %v1130
    %v1136 = vunpack.c.l.b16 %v998
    %v1137 = vunpack.c.l.b16 %v999
    %v1138 = vunpack.c.l.b16 %v1000
    %v1139 = vunpack.c.l.b16 %v1001
    %v1140 = vpack.c.b16 %v1137, %v1136
    %v1141 = vpack.c.b16 %v1139, %v1138
    %v1145 = vsel %vm32, %v1123, 0
    %v1148 = vsel %vm32, %v1131, 0
    %1150 = vmatprep.subr.bf16.mxu0 0
    %1151 = vmatpush1.bf16.msra.mxu0 %v1140
    %1152 = vmatprep.subr.bf16.mxu0 0
    %1153 = vmatpush1.bf16.msra.mxu0 %v1141
    %1154 = vmatprep.subr.bf16.mxu0 0
    %1155 = vmatpush1.bf16.msra.mxu0 0
    %1156 = vmatprep.subr.bf16.mxu0 0
    %1157 = vmatpush1.bf16.msra.mxu0 0
    %1158 = vmatprep.subr.bf16.mxu0 0
    %1159 = vmatpush1.bf16.msra.mxu0 0
    %1160 = vmatprep.subr.bf16.mxu0 0
    %1161 = vmatpush1.bf16.msra.mxu0 0
    %1162 = vmatprep.subr.bf16.mxu0 0
    %1163 = vmatpush1.bf16.msra.mxu0 0
    %1164 = vmatprep.subr.bf16.mxu0 0
    %1165 = vmatpush1.bf16.msra.mxu0 0
    %1166 = vmatprep.subr.bf16.mxu0 0
    %1167 = vmatpush1.bf16.msra.mxu0 0
    %1168 = vmatprep.subr.bf16.mxu0 0
    %1169 = vmatpush1.bf16.msra.mxu0 0
    %1170 = vmatprep.subr.bf16.mxu0 0
    %1171 = vmatpush1.bf16.msra.mxu0 0
    %1172 = vmatprep.subr.bf16.mxu0 0
    %1173 = vmatpush1.bf16.msra.mxu0 0
    %1174 = vmatprep.subr.bf16.mxu0 0
    %1175 = vmatpush1.bf16.msra.mxu0 0
    %1176 = vmatprep.subr.bf16.mxu0 0
    %1177 = vmatpush1.bf16.msra.mxu0 0
    %1178 = vmatprep.subr.bf16.mxu0 0
    %1179 = vmatpush1.bf16.msra.mxu0 0
    %1180 = vmatprep.subr.bf16.mxu0 0
    %1181 = vmatpush1.bf16.msra.mxu0 0
    %1182 = vmatprep.mubr.bf16.mxu0 0
    %1183 = vmatmul.mubr.bf16.gmra.mrb[0].mxu0 %v1145
    %v1184 = vpop.f32.mrb[0].mxu0
    %v1185 = vadd.f32 0.0, %v1184
    %v1186 = vpop.f32.mrb[0].mxu0
    %v1187 = vpop.f32.mrb[0].mxu0
    %v1188 = vadd.f32 0.0, %v1187
    %v1189 = vpop.f32.mrb[0].mxu0
    %1190 = vmatprep.mubr.bf16.mxu0 0
    %1191 = vmatmul.mubr.bf16.gmra.mrb[0].mxu0 %v1148
    %v1192 = vpop.f32.mrb[0].mxu0
    %v1193 = vadd.f32 0.0, %v1192
    %v1194 = vpop.f32.mrb[0].mxu0
    %v1195 = vpop.f32.mrb[0].mxu0
    %v1196 = vpop.f32.mrb[0].mxu0
    %1197 = vdwg.mxu0
    %v1201 = vcombine.high %v1185, %v1185
    %v1202 = vcombine.high %v1188, %v1188
    %v1203 = vcombine.high %v1193, %v1193
    %v1207 = vadd.f32 %v989, %v1185
    %v1208 = vadd.f32 %v990, %v1201
    %v1209 = vadd.f32 %v991, %v1188
    %v1210 = vadd.f32 %v992, %v1202
    %v1211 = vadd.f32 %v993, %v1193
    %v1212 = vadd.f32 %v994, %v1203
    %v1213 = vld [vmem:[#allocation2] sm:$0xfc]
    %v1214 = vld [vmem:[#allocation2 + $0x8] sm:$0xfc]
    %s1215 = scalar_lea.vmem %s2, 64
    %v1216 = vld [vmem:[%s1215] sm:$0xf]
    %v1217 = vld [vmem:[%s1215 + $0x4] sm:$0xf]
    %v1218 = vld [vmem:[%s1215 + $0x8] sm:$0xf]
    %v1219 = vld [vmem:[%s1215 + $0xc] sm:$0xf]
    %v1222 = vcombine.high %v1213, %v1213
    %v1224 = vunpack.c.l.s4 1983009808
    %v1225 = vunpack.c.0.s8 %v1224
    %v1226 = vlaneseq
    %v1227 = vshrl.u32 %v1226, 7
    %v1228 = vsub.s32 %v1225, %v1227
    %v1229 = vrot.slane %v1213, %v1228
    %v1231 = vunpack.c.l.s4 1983009808
    %v1232 = vunpack.c.0.s8 %v1231
    %v1233 = vlaneseq
    %v1234 = vshrl.u32 %v1233, 7
    %v1235 = vsub.s32 %v1232, %v1234
    %v1236 = vrot.slane %v1222, %v1235
    %v1237 = vcombine.high %v1229, %v1229
    %v1238 = vcombine.high %v1236, %v1236
    %v1239 = vcombine.high %v1214, %v1214
    %v1241 = vunpack.c.l.s4 1983009808
    %v1242 = vunpack.c.0.s8 %v1241
    %v1243 = vlaneseq
    %v1244 = vshrl.u32 %v1243, 7
    %v1245 = vsub.s32 %v1242, %v1244
    %v1246 = vrot.slane %v1214, %v1245
    %v1248 = vunpack.c.l.s4 1983009808
    %v1249 = vunpack.c.0.s8 %v1248
    %v1250 = vlaneseq
    %v1251 = vshrl.u32 %v1250, 7
    %v1252 = vsub.s32 %v1249, %v1251
    %v1253 = vrot.slane %v1239, %v1252
    %v1254 = vcombine.high %v1246, %v1246
    %v1255 = vcombine.high %v1253, %v1253
    %v1256 = vcombine.low %v1237, %v1236
    %v1257 = vcombine.low %v1238, %v1254
    %v1259 = vunpack.c.l.s4 1983009808
    %v1260 = vunpack.c.0.s8 %v1259
    %v1261 = vlaneseq
    %v1262 = vshrl.u32 %v1261, 7
    %v1263 = vsub.s32 %v1260, %v1262
    %v1264 = vrot.slane %v1256, %v1263
    %v1266 = vunpack.c.l.s4 1983009808
    %v1267 = vunpack.c.0.s8 %v1266
    %v1268 = vlaneseq
    %v1269 = vshrl.u32 %v1268, 7
    %v1270 = vsub.s32 %v1267, %v1269
    %v1271 = vrot.slane %v1257, %v1270
    %v1272 = vcombine.low %v1264, %v1271
    %v1273 = vcombine.low %v1253, %v1255
    %v1275 = vunpack.c.l.s4 1983009808
    %v1276 = vunpack.c.0.s8 %v1275
    %v1277 = vlaneseq
    %v1278 = vshrl.u32 %v1277, 7
    %v1279 = vsub.s32 %v1276, %v1278
    %v1280 = vrot.slane %v1273, %v1279
    %v1285 = vunpack.c.l.b16 %v1216
    %v1286 = vunpack.c.l.b16 %v1217
    %v1287 = vunpack.c.l.b16 %v1218
    %v1288 = vunpack.c.l.b16 %v1219
    %v1289 = vpack.c.b16 %v1286, %v1285
    %v1290 = vpack.c.b16 %v1288, %v1287
    %v1294 = vsel %vm32, %v1272, 0
    %v1297 = vsel %vm32, %v1280, 0
    %1299 = vmatprep.subr.bf16.mxu0 0
    %1300 = vmatpush1.bf16.msra.mxu0 %v1289
    %1301 = vmatprep.subr.bf16.mxu0 0
    %1302 = vmatpush1.bf16.msra.mxu0 %v1290
    %1303 = vmatprep.subr.bf16.mxu0 0
    %1304 = vmatpush1.bf16.msra.mxu0 0
    %1305 = vmatprep.subr.bf16.mxu0 0
    %1306 = vmatpush1.bf16.msra.mxu0 0
    %1307 = vmatprep.subr.bf16.mxu0 0
    %1308 = vmatpush1.bf16.msra.mxu0 0
    %1309 = vmatprep.subr.bf16.mxu0 0
    %1310 = vmatpush1.bf16.msra.mxu0 0
    %1311 = vmatprep.subr.bf16.mxu0 0
    %1312 = vmatpush1.bf16.msra.mxu0 0
    %1313 = vmatprep.subr.bf16.mxu0 0
    %1314 = vmatpush1.bf16.msra.mxu0 0
    %1315 = vmatprep.subr.bf16.mxu0 0
    %1316 = vmatpush1.bf16.msra.mxu0 0
    %1317 = vmatprep.subr.bf16.mxu0 0
    %1318 = vmatpush1.bf16.msra.mxu0 0
    %1319 = vmatprep.subr.bf16.mxu0 0
    %1320 = vmatpush1.bf16.msra.mxu0 0
    %1321 = vmatprep.subr.bf16.mxu0 0
    %1322 = vmatpush1.bf16.msra.mxu0 0
    %1323 = vmatprep.subr.bf16.mxu0 0
    %1324 = vmatpush1.bf16.msra.mxu0 0
    %1325 = vmatprep.subr.bf16.mxu0 0
    %1326 = vmatpush1.bf16.msra.mxu0 0
    %1327 = vmatprep.subr.bf16.mxu0 0
    %1328 = vmatpush1.bf16.msra.mxu0 0
    %1329 = vmatprep.subr.bf16.mxu0 0
    %1330 = vmatpush1.bf16.msra.mxu0 0
    %1331 = vmatprep.mubr.bf16.mxu0 0
    %1332 = vmatmul.mubr.bf16.gmra.mrb[0].mxu0 %v1294
    %v1333 = vpop.f32.mrb[0].mxu0
    %v1334 = vadd.f32 0.0, %v1333
    %v1335 = vpop.f32.mrb[0].mxu0
    %v1336 = vpop.f32.mrb[0].mxu0
    %v1337 = vadd.f32 0.0, %v1336
    %v1338 = vpop.f32.mrb[0].mxu0
    %1339 = vmatprep.mubr.bf16.mxu0 0
    %1340 = vmatmul.mubr.bf16.gmra.mrb[0].mxu0 %v1297
    %v1341 = vpop.f32.mrb[0].mxu0
    %v1342 = vadd.f32 0.0, %v1341
    %v1343 = vpop.f32.mrb[0].mxu0
    %v1344 = vpop.f32.mrb[0].mxu0
    %v1345 = vpop.f32.mrb[0].mxu0
    %1346 = vdwg.mxu0
    %v1350 = vcombine.high %v1334, %v1334
    %v1351 = vcombine.high %v1337, %v1337
    %v1352 = vcombine.high %v1342, %v1342
    %v1356 = vadd.f32 %v1207, %v1334
    %v1357 = vadd.f32 %v1208, %v1350
    %v1358 = vadd.f32 %v1209, %v1337
    %v1359 = vadd.f32 %v1210, %v1351
    %v1360 = vadd.f32 %v1211, %v1342
    %v1361 = vadd.f32 %v1212, %v1352
    %v1362 = vld [vmem:[%s3] sm:$0x1]
    %v1364 = vlaneseq
    %v1365 = vshrl.u32 %v1364, 7
    %v1366 = vsub.s32 0, %v1365
    %v1367 = vrot.slane %v1362, %v1366
    %v1369 = vcombine.high %v1367, %v1367
    %v1371 = vadd.f32 %v1356, %v1367
    %v1372 = vadd.f32 %v1357, %v1369
    %v1373 = vadd.f32 %v1358, %v1367
    %v1374 = vadd.f32 %v1359, %v1367
    %v1375 = vadd.f32 %v1360, %v1369
    %v1376 = vadd.f32 %v1361, %v1367
    %v1377 = vmax.f32 %v1371, 0.0
    %v1378 = vmax.f32 %v1372, 0.0
    %v1379 = vmax.f32 %v1373, 0.0
    %v1380 = vmax.f32 %v1374, 0.0
    %v1381 = vmax.f32 %v1375, 0.0
    %v1382 = vmax.f32 %v1376, 0.0
    %v1383 = vld [vmem:[%s4] sm:$0xff]
    %v1384 = vld [vmem:[%s4 + $0x8] sm:$0xf]
    %v1386 = vcombine.high %v1383, %v1383
    %v1388 = vmul.f32 %v1377, %v1383
    %v1389 = vmul.f32 %v1378, %v1386
    %v1390 = vmul.f32 %v1379, %v1384
    %v1391 = vmul.f32 %v1380, %v1383
    %v1392 = vmul.f32 %v1381, %v1386
    %v1393 = vmul.f32 %v1382, %v1384
    %v1398 = vcombine.low %v1388, %v1389
    %v1399 = vcombine.low %v1391, %v1392
    %vm1402 = vcmask 1043456
    %v1403 = vsel %vm1402, %v1390, 0.0
    %v1404 = vadd.f32 %v1398, %v1403
    %v1405 = vrot.slane %v1404, 4
    %v1406 = vadd.f32 %v1404, %v1405
    %v1407 = vrot.slane %v1406, 2
    %v1408 = vadd.f32 %v1406, %v1407
    %v1409 = vrot.slane %v1408, 1
    %v1410 = vadd.f32 %v1408, %v1409
    %v1411 = vsel %vm1402, %v1393, 0.0
    %v1412 = vadd.f32 %v1399, %v1411
    %v1413 = vrot.slane %v1412, 4
    %v1414 = vadd.f32 %v1412, %v1413
    %v1415 = vrot.slane %v1414, 2
    %v1416 = vadd.f32 %v1414, %v1415
    %v1417 = vrot.slane %v1416, 1
    %v1418 = vadd.f32 %v1416, %v1417
    %v1419 = vld [vmem:[%s5] sm:$0xff]
    %v1420 = vld [vmem:[%s5 + $0x8] sm:$0xff]
    %v1421 = vld [vmem:[%s5 + $0x10] sm:$0xff]
    %v1422 = vld [vmem:[%s5 + $0x18] sm:$0xff]
    %v1423 = vld [vmem:[%s5 + $0x20] sm:$0xff]
    %v1424 = vld [vmem:[%s5 + $0x28] sm:$0xff]
    %v1425 = vld [vmem:[%s5 + $0x30] sm:$0xff]
    %v1426 = vld [vmem:[%s5 + $0x38] sm:$0xff]
    %v1427 = vld [vmem:[%s5 + $0x40] sm:$0xff]
    %v1428 = vld [vmem:[%s5 + $0x48] sm:$0xff]
    %v1429 = vld [vmem:[%s5 + $0x50] sm:$0xff]
    %v1430 = vld [vmem:[%s5 + $0x58] sm:$0xff]
    %v1431 = vld [vmem:[%s5 + $0x60] sm:$0xff]
    %v1432 = vld [vmem:[%s5 + $0x68] sm:$0xff]
    %v1433 = vld [vmem:[%s5 + $0x70] sm:$0xff]
    %v1434 = vld [vmem:[%s5 + $0x78] sm:$0xff]
    %v1435 = vld [vmem:[%s6] sm:$0x1]
    %v1437 = vlaneseq
    %v1438 = vshrl.u32 %v1437, 7
    %v1439 = vsub.s32 0, %v1438
    %v1440 = vrot.slane %v1435, %v1439
    %vm1444 = vcmask 1041409
    %v1445 = vsel %vm1444, %v1418, %v1410
    %1447 = vmatprep.subr.mxu0 0.0
    %1448 = vmatpush1.msra.mxu0 %v1419
    %1449 = vmatprep.subr.mxu0 0.0
    %1450 = vmatpush1.msra.mxu0 %v1420
    %1451 = vmatprep.subr.mxu0 0.0
    %1452 = vmatpush1.msra.mxu0 %v1421
    %1453 = vmatprep.subr.mxu0 0.0
    %1454 = vmatpush1.msra.mxu0 %v1422
    %1455 = vmatprep.subr.mxu0 0.0
    %1456 = vmatpush1.msra.mxu0 %v1423
    %1457 = vmatprep.subr.mxu0 0.0
    %1458 = vmatpush1.msra.mxu0 %v1424
    %1459 = vmatprep.subr.mxu0 0.0
    %1460 = vmatpush1.msra.mxu0 %v1425
    %1461 = vmatprep.subr.mxu0 0.0
    %1462 = vmatpush1.msra.mxu0 %v1426
    %1463 = vmatprep.subr.mxu0 0.0
    %1464 = vmatpush1.msra.mxu0 %v1427
    %1465 = vmatprep.subr.mxu0 0.0
    %1466 = vmatpush1.msra.mxu0 %v1428
    %1467 = vmatprep.subr.mxu0 0.0
    %1468 = vmatpush1.msra.mxu0 %v1429
    %1469 = vmatprep.subr.mxu0 0.0
    %1470 = vmatpush1.msra.mxu0 %v1430
    %1471 = vmatprep.subr.mxu0 0.0
    %1472 = vmatpush1.msra.mxu0 %v1431
    %1473 = vmatprep.subr.mxu0 0.0
    %1474 = vmatpush1.msra.mxu0 %v1432
    %1475 = vmatprep.subr.mxu0 0.0
    %1476 = vmatpush1.msra.mxu0 %v1433
    %1477 = vmatprep.subr.mxu0 0.0
    %1478 = vmatpush1.msra.mxu0 %v1434
    %1479 = vmatprep.subr.mxu0 0.0
    %1480 = vmatpush1.msra.mxu0 0.0
    %1481 = vmatprep.subr.mxu0 0.0
    %1482 = vmatpush1.msra.mxu0 0.0
    %1483 = vmatprep.subr.mxu0 0.0
    %1484 = vmatpush1.msra.mxu0 0.0
    %1485 = vmatprep.subr.mxu0 0.0
    %1486 = vmatpush1.msra.mxu0 0.0
    %1487 = vmatprep.subr.mxu0 0.0
    %1488 = vmatpush1.msra.mxu0 0.0
    %1489 = vmatprep.subr.mxu0 0.0
    %1490 = vmatpush1.msra.mxu0 0.0
    %1491 = vmatprep.subr.mxu0 0.0
    %1492 = vmatpush1.msra.mxu0 0.0
    %1493 = vmatprep.subr.mxu0 0.0
    %1494 = vmatpush1.msra.mxu0 0.0
    %1495 = vmatprep.subr.mxu0 0.0
    %1496 = vmatpush1.msra.mxu0 0.0
    %1497 = vmatprep.subr.mxu0 0.0
    %1498 = vmatpush1.msra.mxu0 0.0
    %1499 = vmatprep.subr.mxu0 0.0
    %1500 = vmatpush1.msra.mxu0 0.0
    %1501 = vmatprep.subr.mxu0 0.0
    %1502 = vmatpush1.msra.mxu0 0.0
    %1503 = vmatprep.subr.mxu0 0.0
    %1504 = vmatpush1.msra.mxu0 0.0
    %1505 = vmatprep.subr.mxu0 0.0
    %1506 = vmatpush1.msra.mxu0 0.0
    %1507 = vmatprep.subr.mxu0 0.0
    %1508 = vmatpush1.msra.mxu0 0.0
    %1509 = vmatprep.subr.mxu0 0.0
    %1510 = vmatpush1.msra.mxu0 0.0
    %1511 = vmatprep.mubr.f32.mxu0 0.0
    %1512 = vmatmul.mubr.f32.gmra.mrb[0].mxu0 %v1445
    %v1513 = vpop.f32.mrb[0].mxu0
    %v1514 = vadd.f32 %v1440, %v1513
    %v1515 = vpop.f32.mrb[0].mxu0
    %1516 = vdwg.mxu0
    %vm1517 = vcmask 33792
    %1518 = vst.msk [vmem:[#allocation5] sm:$0x3] %vm1517, %v1514
    // Predicated region
    $region26: #{tpu_custom_call.1} parent=1 // pred_check
      _
    $region27: #{tpu_custom_call.1} parent=1 // pred_check_branch
      %1520 = sbr.rel (0) target = $region29
    $region28: #{tpu_custom_call.1} parent=1 // pred_region
      %s1522 = ssub.s32 32, 32
      %1523 = vsyncadd [#allocation6], %s1522
      %s1525 = sshll.u32 [#allocation5], 4
      %s1526 = int_to_ptr.vmem [resolvable:$true] %s1525
      %1528 = dma.vmem_to_hbm [thread:$0]  %s1526, 32, %s7, [#allocation6]
    $region29: #{tpu_custom_call.1} parent=1 // pred_fallthru
      _
    // Predicated region
    $region30: #{tpu_custom_call.1} parent=1 // pred_check
      _
    $region31: #{tpu_custom_call.1} parent=1 // pred_check_branch
      %1530 = sbr.rel (0) target = $region33
    $region32: #{tpu_custom_call.1} parent=1 // pred_region
      %1531 = dma.done [#allocation6], 32
    $region33: #{tpu_custom_call.1} parent=1 // pred_fallthru
      _
    %1532 = vsyncpa [#allocation6], 1

</llo_original>
